<compile_context>
chip_gen: v6e
topology: v6e:2x2x1
jax: 0.10.0
libtpu: 0.0.40
codegen_flags: <defaults>
</compile_context>

<pallas_src>
import jax
import jax.numpy as jnp
from jax.experimental import pallas as pl
from jax.experimental.pallas import tpu as pltpu


# ------------------------------------------------------------------ kernel
def fused_rotation_mlp_kernel(x_ref, q_ref, w1_ref, b1_ref, w2_ref, b2_ref,
                              w3_ref, b3_ref, o_ref):
    nb, d = x_ref.shape

    # proj(): x @ Q -- stays in vregs/VMEM, never round-trips through HBM.
    xp = jnp.dot(x_ref[...], q_ref[...], preferred_element_type=jnp.float32)   # (nb, d)

    # apply_mask(): strictly-lower-triangular mask built on the (idle) VPU via iota,
    # row-repeat built via a sublane broadcast; leading-dim collapse reshape is a
    # layout no-op.  Rows ordered r = a*d + i (sample-major).
    i_idx = jax.lax.broadcasted_iota(jnp.int32, (d, d), 0)   # mask index i
    j_idx = jax.lax.broadcasted_iota(jnp.int32, (d, d), 1)   # feature index j
    tri = (j_idx < i_idx).astype(jnp.float32)                # (d, d): keep features j < i
    xm = (xp[:, None, :] * tri[None, :, :]).reshape(nb * d, d)                 # (nb*d, d)

    # MLP: Linear -> ReLU -> Linear -> ReLU -> Linear (residual=False), run once on the
    # full M = nb*d row block.
    h = jnp.maximum(
        jnp.dot(xm, w1_ref[...], preferred_element_type=jnp.float32) + b1_ref[...], 0.0)
    h = jnp.maximum(
        jnp.dot(h, w2_ref[...], preferred_element_type=jnp.float32) + b2_ref[...], 0.0)
    o_ref[...] = (
        jnp.dot(h, w3_ref[...], preferred_element_type=jnp.float32) + b3_ref[...])


# ------------------------------------------------------------------ wrapper (jitted)
def _forward_impl(x, Q, W1, b1, W2, b2, W3, b3, *, block_n):
    """Everything up to nits_model.pdf: returns params of shape (n, n_params * d)."""
    n, d = x.shape
    n_params = W3.shape[1]
    nb = block_n
    assert n % nb == 0, "batch must be divisible by block_n"

    const = lambda i: (0, 0)   # weights / Q / biases: DMA'd once, VMEM-resident

    out = pl.pallas_call(
        fused_rotation_mlp_kernel,
        grid=(n // nb,),
        in_specs=[
            pl.BlockSpec((nb, d), lambda i: (i, 0)),     # x: per-block rows
            pl.BlockSpec(Q.shape, const),
            pl.BlockSpec(W1.shape, const),
            pl.BlockSpec(b1.shape, const),
            pl.BlockSpec(W2.shape, const),
            pl.BlockSpec(b2.shape, const),
            pl.BlockSpec(W3.shape, const),
            pl.BlockSpec(b3.shape, const),
        ],
        out_specs=pl.BlockSpec((nb * d, n_params), lambda i: (i, 0)),
        out_shape=jax.ShapeDtypeStruct((n * d, n_params), jnp.float32),
        compiler_params=pltpu.CompilerParams(dimension_semantics=("parallel",)),
    )(x, Q, W1, b1, W2, b2, W3, b3)

    # Rows are already sample-major -> metadata-only contiguous reshape.
    return out.reshape(n, n_params * d)


rotation_param_forward = jax.jit(_forward_impl, static_argnames=("block_n",))


# ------------------------------------------------------------------ reference (plain JAX)
def reference(x, Q, W1, b1, W2, b2, W3, b3):
    n, d = x.shape
    n_params = W3.shape[1]
    xp = x @ Q
    mask = (jnp.arange(d)[None, :] < jnp.arange(d)[:, None]).astype(x.dtype)
    xm = (xp[:, None, :] * mask[None, :, :]).reshape(n * d, d)
    h = jnp.maximum(xm @ W1 + b1, 0.0)
    h = jnp.maximum(h @ W2 + b2, 0.0)
    out = h @ W3 + b3
    return out.reshape(n, n_params * d)


# ------------------------------------------------------------------ main
if __name__ == "__main__":
    # Small shapes consistent with the module: arch = [d, hidden, hidden, n_params].
    # n = 128 samples batched so each grid block processes block_n*d = 256 MLP rows.
    n, d, hidden, n_params = 128, 8, 32, 16
    block_n = 32
    arch = [d, hidden, hidden, n_params]

    key = jax.random.PRNGKey(0)
    kx, kA, k1, k2, k3, kb1, kb2, kb3 = jax.random.split(key, 8)

    x = jax.random.normal(kx, (n, d), jnp.float32)
    A = jax.random.normal(kA, (d, d), jnp.float32)          # rotation parameter (rotate=True)
    W1 = jax.random.normal(k1, (arch[0], arch[1]), jnp.float32) * 0.1
    W2 = jax.random.normal(k2, (arch[1], arch[2]), jnp.float32) * 0.1
    W3 = jax.random.normal(k3, (arch[2], arch[3]), jnp.float32) * 0.1
    b1 = jax.random.normal(kb1, (1, arch[1]), jnp.float32) * 0.1
    b2 = jax.random.normal(kb2, (1, arch[2]), jnp.float32) * 0.1
    b3 = jax.random.normal(kb3, (1, arch[3]), jnp.float32) * 0.1

    # QR has no Pallas equivalent; hoisted out of the hot path (A only changes per
    # optimizer step, so Q can be cached between forward calls).
    Q, _ = jnp.linalg.qr(A)

    params = rotation_param_forward(x, Q, W1, b1, W2, b2, W3, b3, block_n=block_n)
    params = jax.block_until_ready(params)

    ref = reference(x, Q, W1, b1, W2, b2, W3, b3)
    assert params.shape == (n, n_params * d)
    assert jnp.allclose(params, ref, atol=1e-4, rtol=1e-4), "mismatch vs. reference"

    # TODO(synk): nits_model.pdf is an external dependency not defined in the module, so the
    # final `(pdf(x, params) + 1e-10).log().sum()` reduction is omitted; params is returned.
    print("KERNEL_OK")
</pallas_src>

<mosaic_0001>
module attributes {stable_mosaic.version = 11 : i64} {
  func.func @fused_rotation_mlp_kernel(%arg0: i32, %arg1: memref<32x8xf32, #tpu.memory_space<vmem>>, %arg2: memref<8x8xf32, #tpu.memory_space<vmem>>, %arg3: memref<8x32xf32, #tpu.memory_space<vmem>>, %arg4: memref<1x32xf32, #tpu.memory_space<vmem>>, %arg5: memref<32x32xf32, #tpu.memory_space<vmem>>, %arg6: memref<1x32xf32, #tpu.memory_space<vmem>>, %arg7: memref<32x16xf32, #tpu.memory_space<vmem>>, %arg8: memref<1x16xf32, #tpu.memory_space<vmem>>, %arg9: memref<256x16xf32, #tpu.memory_space<vmem>>) attributes {dimension_semantics = [#tpu.dimension_semantics<parallel>], iteration_bounds = array<i64: 4>, scalar_prefetch = 0 : i64, scratch_operands = 0 : i64, tpu.core_type = #tpu.core_type<tc>, window_params = [{transform_indices = @transform_0, window_bounds = array<i64: 32, 8>}, {pipeline_mode = #tpu.pipeline_mode<synchronous>, transform_indices = @transform_1, window_bounds = array<i64: 8, 8>}, {pipeline_mode = #tpu.pipeline_mode<synchronous>, transform_indices = @transform_2, window_bounds = array<i64: 8, 32>}, {pipeline_mode = #tpu.pipeline_mode<synchronous>, transform_indices = @transform_3, window_bounds = array<i64: 1, 32>}, {pipeline_mode = #tpu.pipeline_mode<synchronous>, transform_indices = @transform_4, window_bounds = array<i64: 32, 32>}, {pipeline_mode = #tpu.pipeline_mode<synchronous>, transform_indices = @transform_5, window_bounds = array<i64: 1, 32>}, {pipeline_mode = #tpu.pipeline_mode<synchronous>, transform_indices = @transform_6, window_bounds = array<i64: 32, 16>}, {pipeline_mode = #tpu.pipeline_mode<synchronous>, transform_indices = @transform_7, window_bounds = array<i64: 1, 16>}, {transform_indices = @transform_8, window_bounds = array<i64: 256, 16>}]} {
    %c0 = arith.constant 0 : index
    %c0_0 = arith.constant 0 : index
    %0 = vector.load %arg1[%c0, %c0_0] : memref<32x8xf32, #tpu.memory_space<vmem>>, vector<32x8xf32>
    %c0_1 = arith.constant 0 : index
    %c0_2 = arith.constant 0 : index
    %1 = vector.load %arg2[%c0_1, %c0_2] : memref<8x8xf32, #tpu.memory_space<vmem>>, vector<8x8xf32>
    %cst = arith.constant dense<0.000000e+00> : vector<32x8xf32>
    %2 = tpu.matmul %0, %1, %cst {dimension_numbers = #tpu.dot_dimension_numbers<[1], [0], [0], [1], [0, 0, 1, 1], [], []>} : vector<32x8xf32>, vector<8x8xf32>, vector<32x8xf32> -> vector<32x8xf32>
    %3 = tpu.iota {dimensions = array<i32: 0>} : vector<8x8xi32>
    %4 = tpu.iota {dimensions = array<i32: 1>} : vector<8x8xi32>
    %5 = arith.cmpi slt, %4, %3 : vector<8x8xi32>
    %6 = arith.extui %5 : vector<8x8xi1> to vector<8x8xi32>
    %7 = arith.sitofp %6 : vector<8x8xi32> to vector<8x8xf32>
    %8 = vector.shape_cast %2 : vector<32x8xf32> to vector<32x1x8xf32>
    %9 = vector.shape_cast %7 : vector<8x8xf32> to vector<1x8x8xf32>
    %10 = vector.broadcast %8 : vector<32x1x8xf32> to vector<32x8x8xf32>
    %11 = vector.broadcast %9 : vector<1x8x8xf32> to vector<32x8x8xf32>
    %12 = arith.mulf %10, %11 : vector<32x8x8xf32>
    %13 = vector.shape_cast %12 : vector<32x8x8xf32> to vector<256x8xf32>
    %c0_3 = arith.constant 0 : index
    %c0_4 = arith.constant 0 : index
    %14 = vector.load %arg3[%c0_3, %c0_4] : memref<8x32xf32, #tpu.memory_space<vmem>>, vector<8x32xf32>
    %cst_5 = arith.constant dense<0.000000e+00> : vector<256x32xf32>
    %15 = tpu.matmul %13, %14, %cst_5 {dimension_numbers = #tpu.dot_dimension_numbers<[1], [0], [0], [1], [0, 0, 1, 1], [], []>} : vector<256x8xf32>, vector<8x32xf32>, vector<256x32xf32> -> vector<256x32xf32>
    %c0_6 = arith.constant 0 : index
    %c0_7 = arith.constant 0 : index
    %16 = vector.load %arg4[%c0_6, %c0_7] : memref<1x32xf32, #tpu.memory_space<vmem>>, vector<1x32xf32>
    %17 = vector.broadcast %16 : vector<1x32xf32> to vector<256x32xf32>
    %18 = arith.addf %15, %17 : vector<256x32xf32>
    %cst_8 = arith.constant 0.000000e+00 : f32
    %19 = vector.broadcast %cst_8 : f32 to vector<256x32xf32>
    %20 = arith.maximumf %18, %19 : vector<256x32xf32>
    %c0_9 = arith.constant 0 : index
    %c0_10 = arith.constant 0 : index
    %21 = vector.load %arg5[%c0_9, %c0_10] : memref<32x32xf32, #tpu.memory_space<vmem>>, vector<32x32xf32>
    %cst_11 = arith.constant dense<0.000000e+00> : vector<256x32xf32>
    %22 = tpu.matmul %20, %21, %cst_11 {dimension_numbers = #tpu.dot_dimension_numbers<[1], [0], [0], [1], [0, 0, 1, 1], [], []>} : vector<256x32xf32>, vector<32x32xf32>, vector<256x32xf32> -> vector<256x32xf32>
    %c0_12 = arith.constant 0 : index
    %c0_13 = arith.constant 0 : index
    %23 = vector.load %arg6[%c0_12, %c0_13] : memref<1x32xf32, #tpu.memory_space<vmem>>, vector<1x32xf32>
    %24 = vector.broadcast %23 : vector<1x32xf32> to vector<256x32xf32>
    %25 = arith.addf %22, %24 : vector<256x32xf32>
    %cst_14 = arith.constant 0.000000e+00 : f32
    %26 = vector.broadcast %cst_14 : f32 to vector<256x32xf32>
    %27 = arith.maximumf %25, %26 : vector<256x32xf32>
    %c0_15 = arith.constant 0 : index
    %c0_16 = arith.constant 0 : index
    %28 = vector.load %arg7[%c0_15, %c0_16] : memref<32x16xf32, #tpu.memory_space<vmem>>, vector<32x16xf32>
    %cst_17 = arith.constant dense<0.000000e+00> : vector<256x16xf32>
    %29 = tpu.matmul %27, %28, %cst_17 {dimension_numbers = #tpu.dot_dimension_numbers<[1], [0], [0], [1], [0, 0, 1, 1], [], []>} : vector<256x32xf32>, vector<32x16xf32>, vector<256x16xf32> -> vector<256x16xf32>
    %c0_18 = arith.constant 0 : index
    %c0_19 = arith.constant 0 : index
    %30 = vector.load %arg8[%c0_18, %c0_19] : memref<1x16xf32, #tpu.memory_space<vmem>>, vector<1x16xf32>
    %31 = vector.broadcast %30 : vector<1x16xf32> to vector<256x16xf32>
    %32 = arith.addf %29, %31 : vector<256x16xf32>
    %c0_20 = arith.constant 0 : index
    %c0_21 = arith.constant 0 : index
    %33 = vector.load %arg9[%c0_20, %c0_21] : memref<256x16xf32, #tpu.memory_space<vmem>>, vector<256x16xf32>
    tpu.vector_store %arg9[%c0_20, %c0_21], %32 {strides = array<i32>} : memref<256x16xf32, #tpu.memory_space<vmem>>, vector<256x16xf32>,
    return
  }
  func.func @transform_0(%arg0: i32) -> (i32, i32) {
    %c0_i32 = arith.constant 0 : i32
    %c0_i32_0 = arith.constant 0 : i32
    return %arg0, %c0_i32 : i32, i32
  }
  func.func @transform_1(%arg0: i32) -> (i32, i32) {
    %c0_i32 = arith.constant 0 : i32
    %c0_i32_0 = arith.constant 0 : i32
    %c0_i32_1 = arith.constant 0 : i32
    return %c0_i32, %c0_i32_0 : i32, i32
  }
  func.func @transform_2(%arg0: i32) -> (i32, i32) {
    %c0_i32 = arith.constant 0 : i32
    %c0_i32_0 = arith.constant 0 : i32
    %c0_i32_1 = arith.constant 0 : i32
    return %c0_i32, %c0_i32_0 : i32, i32
  }
  func.func @transform_3(%arg0: i32) -> (i32, i32) {
    %c0_i32 = arith.constant 0 : i32
    %c0_i32_0 = arith.constant 0 : i32
    %c0_i32_1 = arith.constant 0 : i32
    return %c0_i32, %c0_i32_0 : i32, i32
  }
  func.func @transform_4(%arg0: i32) -> (i32, i32) {
    %c0_i32 = arith.constant 0 : i32
    %c0_i32_0 = arith.constant 0 : i32
    %c0_i32_1 = arith.constant 0 : i32
    return %c0_i32, %c0_i32_0 : i32, i32
  }
  func.func @transform_5(%arg0: i32) -> (i32, i32) {
    %c0_i32 = arith.constant 0 : i32
    %c0_i32_0 = arith.constant 0 : i32
    %c0_i32_1 = arith.constant 0 : i32
    return %c0_i32, %c0_i32_0 : i32, i32
  }
  func.func @transform_6(%arg0: i32) -> (i32, i32) {
    %c0_i32 = arith.constant 0 : i32
    %c0_i32_0 = arith.constant 0 : i32
    %c0_i32_1 = arith.constant 0 : i32
    return %c0_i32, %c0_i32_0 : i32, i32
  }
  func.func @transform_7(%arg0: i32) -> (i32, i32) {
    %c0_i32 = arith.constant 0 : i32
    %c0_i32_0 = arith.constant 0 : i32
    %c0_i32_1 = arith.constant 0 : i32
    return %c0_i32, %c0_i32_0 : i32, i32
  }
  func.func @transform_8(%arg0: i32) -> (i32, i32) {
    %c0_i32 = arith.constant 0 : i32
    %c0_i32_0 = arith.constant 0 : i32
    return %arg0, %c0_i32 : i32, i32
  }
}

</mosaic_0001>

<llo_original>
// kernel: _forward_impl.1
$region0: #{_forward_impl.1}
  #allocation0 [shape = 'u32[]', space=smem, size = 0x4, offset = 0x4, fixed_abs, tag = 'smem constant byte address 0x4 - core index']
  #allocation1 [shape = 'u32[144,128]{1,0:T(1,128)}', space=vmem, size = 0x12000, scoped, tag = 'internal scratch']
  %s0 = inlined_call_operand.vmem [shape: f32[128,8], index: 0, kind: input, shape index: {}]
  %s1 = inlined_call_operand.vmem [shape: f32[8,8], index: 1, kind: input, shape index: {}]
  %s2 = inlined_call_operand.vmem [shape: f32[8,32], index: 2, kind: input, shape index: {}]
  %s3 = inlined_call_operand.vmem [shape: f32[1,32], index: 3, kind: input, shape index: {}]
  %s4 = inlined_call_operand.vmem [shape: f32[32,32], index: 4, kind: input, shape index: {}]
  %s5 = inlined_call_operand.vmem [shape: f32[1,32], index: 5, kind: input, shape index: {}]
  %s6 = inlined_call_operand.vmem [shape: f32[32,16], index: 6, kind: input, shape index: {}]
  %s7 = inlined_call_operand.vmem [shape: f32[1,16], index: 7, kind: input, shape index: {}]
  %s8 = inlined_call_operand.vmem [shape: f32[1024,16], index: 8, kind: output, shape index: {}]
  %s9 = sld [smem:[#allocation0]]
  $region65: #{_forward_impl.1} parent=0
    _
  %s11 = ssub.s32 1, %s9
  %s12 = scalar_select 0, %s11, %s9
  loop: start=0, step=1, limit=6
  $region2: #{_forward_impl.1} parent=0 // loop_pre_header
    _
  $region3: #{_forward_impl.1} parent=0 // loop_header
    %s14 = sphi 0, %s18
    %p15 = scmp.ge.s32.totalorder %s14, 6
    %s24 = sphi 0, %s26
    %s27 = sphi 0, %s24
    %s28 = sphi 0, %s27
    %s44 = sphi 0, %s28
    %s48 = sphi 0, %s48
    %s50 = sphi 0, %s48
    %s51 = sphi 0, %s50
    %s65 = sphi 0, %s51
    %s69 = sphi 0, %s69
    %s71 = sphi 0, %s69
    %s72 = sphi 0, %s71
    %s86 = sphi 0, %s72
    %s90 = sphi 0, %s90
    %s92 = sphi 0, %s90
    %s93 = sphi 0, %s92
    %s107 = sphi 0, %s93
    %s111 = sphi 0, %s111
    %s113 = sphi 0, %s111
    %s114 = sphi 0, %s113
    %s128 = sphi 0, %s114
    %s132 = sphi 0, %s132
    %s134 = sphi 0, %s132
    %s135 = sphi 0, %s134
    %s149 = sphi 0, %s135
    %s153 = sphi 0, %s153
    %s155 = sphi 0, %s153
    %s156 = sphi 0, %s155
    %s170 = sphi 0, %s156
    %s174 = sphi 0, %s174
    %s176 = sphi 0, %s174
    %s177 = sphi 0, %s176
    %s191 = sphi 0, %s177
    %s197 = sphi 0, %s199
    %s200 = sphi 0, %s197
    %s201 = sphi 0, %s200
    %s217 = sphi 0, %s201
  $region4: #{_forward_impl.1} parent=0 // loop_header_branch
    %17 = sbr.rel (%p15) target = $region8
  $region5: #{_forward_impl.1} parent=0 // loop_body
    %s19 = ssub.s32 %s14, 1
    %s20 = ssub.s32 %s14, 2
    %s21 = sadd.s32 %s14, 1
    %s22 = ssub.s32 %s14, %s21
    %p23 = scmp.eq.s32.totalorder %s22, 0
    %s25 = sadd.s32 %s24, 1
    %s26 = scalar_select %p23, %s24, %s25
    %p29 = pneg %p23
    %p30 = scmp.eq.s32.totalorder %s14, 3
    %p31 = por %p29, %p30
    %p32 = scmp.ne.s32.totalorder %s24, %s27
    %p33 = scmp.eq.s32.totalorder %s14, 0
    %p34 = por %p32, %p33
    %p35 = scmp.ne.s32.totalorder %s24, %s27
    %p36 = scmp.eq.s32.totalorder %s19, 3
    %p37 = por %p35, %p36
    %p38 = scmp.ne.s32.totalorder %s27, %s28
    %p39 = scmp.eq.s32.totalorder %s19, 0
    %p40 = por %p38, %p39
    %p41 = scmp.ne.s32.totalorder %s27, %s28
    %p42 = scmp.eq.s32.totalorder %s20, 3
    %p43 = por %p41, %p42
    %p45 = scmp.ne.s32.totalorder %s28, %s44
    %p46 = scmp.eq.s32.totalorder %s20, 0
    %p47 = por %p45, %p46
    %s49 = sadd.s32 %s48, 1
    %p52 = scmp.eq.s32.totalorder %s14, 3
    %p53 = scmp.ne.s32.totalorder %s48, %s50
    %p54 = scmp.eq.s32.totalorder %s14, 0
    %p55 = por %p53, %p54
    %p56 = scmp.ne.s32.totalorder %s48, %s50
    %p57 = scmp.eq.s32.totalorder %s19, 3
    %p58 = por %p56, %p57
    %p59 = scmp.ne.s32.totalorder %s50, %s51
    %p60 = scmp.eq.s32.totalorder %s19, 0
    %p61 = por %p59, %p60
    %p62 = scmp.ne.s32.totalorder %s50, %s51
    %p63 = scmp.eq.s32.totalorder %s20, 3
    %p64 = por %p62, %p63
    %p66 = scmp.ne.s32.totalorder %s51, %s65
    %p67 = scmp.eq.s32.totalorder %s20, 0
    %p68 = por %p66, %p67
    %s70 = sadd.s32 %s69, 1
    %p73 = scmp.eq.s32.totalorder %s14, 3
    %p74 = scmp.ne.s32.totalorder %s69, %s71
    %p75 = scmp.eq.s32.totalorder %s14, 0
    %p76 = por %p74, %p75
    %p77 = scmp.ne.s32.totalorder %s69, %s71
    %p78 = scmp.eq.s32.totalorder %s19, 3
    %p79 = por %p77, %p78
    %p80 = scmp.ne.s32.totalorder %s71, %s72
    %p81 = scmp.eq.s32.totalorder %s19, 0
    %p82 = por %p80, %p81
    %p83 = scmp.ne.s32.totalorder %s71, %s72
    %p84 = scmp.eq.s32.totalorder %s20, 3
    %p85 = por %p83, %p84
    %p87 = scmp.ne.s32.totalorder %s72, %s86
    %p88 = scmp.eq.s32.totalorder %s20, 0
    %p89 = por %p87, %p88
    %s91 = sadd.s32 %s90, 1
    %p94 = scmp.eq.s32.totalorder %s14, 3
    %p95 = scmp.ne.s32.totalorder %s90, %s92
    %p96 = scmp.eq.s32.totalorder %s14, 0
    %p97 = por %p95, %p96
    %p98 = scmp.ne.s32.totalorder %s90, %s92
    %p99 = scmp.eq.s32.totalorder %s19, 3
    %p100 = por %p98, %p99
    %p101 = scmp.ne.s32.totalorder %s92, %s93
    %p102 = scmp.eq.s32.totalorder %s19, 0
    %p103 = por %p101, %p102
    %p104 = scmp.ne.s32.totalorder %s92, %s93
    %p105 = scmp.eq.s32.totalorder %s20, 3
    %p106 = por %p104, %p105
    %p108 = scmp.ne.s32.totalorder %s93, %s107
    %p109 = scmp.eq.s32.totalorder %s20, 0
    %p110 = por %p108, %p109
    %s112 = sadd.s32 %s111, 1
    %p115 = scmp.eq.s32.totalorder %s14, 3
    %p116 = scmp.ne.s32.totalorder %s111, %s113
    %p117 = scmp.eq.s32.totalorder %s14, 0
    %p118 = por %p116, %p117
    %p119 = scmp.ne.s32.totalorder %s111, %s113
    %p120 = scmp.eq.s32.totalorder %s19, 3
    %p121 = por %p119, %p120
    %p122 = scmp.ne.s32.totalorder %s113, %s114
    %p123 = scmp.eq.s32.totalorder %s19, 0
    %p124 = por %p122, %p123
    %p125 = scmp.ne.s32.totalorder %s113, %s114
    %p126 = scmp.eq.s32.totalorder %s20, 3
    %p127 = por %p125, %p126
    %p129 = scmp.ne.s32.totalorder %s114, %s128
    %p130 = scmp.eq.s32.totalorder %s20, 0
    %p131 = por %p129, %p130
    %s133 = sadd.s32 %s132, 1
    %p136 = scmp.eq.s32.totalorder %s14, 3
    %p137 = scmp.ne.s32.totalorder %s132, %s134
    %p138 = scmp.eq.s32.totalorder %s14, 0
    %p139 = por %p137, %p138
    %p140 = scmp.ne.s32.totalorder %s132, %s134
    %p141 = scmp.eq.s32.totalorder %s19, 3
    %p142 = por %p140, %p141
    %p143 = scmp.ne.s32.totalorder %s134, %s135
    %p144 = scmp.eq.s32.totalorder %s19, 0
    %p145 = por %p143, %p144
    %p146 = scmp.ne.s32.totalorder %s134, %s135
    %p147 = scmp.eq.s32.totalorder %s20, 3
    %p148 = por %p146, %p147
    %p150 = scmp.ne.s32.totalorder %s135, %s149
    %p151 = scmp.eq.s32.totalorder %s20, 0
    %p152 = por %p150, %p151
    %s154 = sadd.s32 %s153, 1
    %p157 = scmp.eq.s32.totalorder %s14, 3
    %p158 = scmp.ne.s32.totalorder %s153, %s155
    %p159 = scmp.eq.s32.totalorder %s14, 0
    %p160 = por %p158, %p159
    %p161 = scmp.ne.s32.totalorder %s153, %s155
    %p162 = scmp.eq.s32.totalorder %s19, 3
    %p163 = por %p161, %p162
    %p164 = scmp.ne.s32.totalorder %s155, %s156
    %p165 = scmp.eq.s32.totalorder %s19, 0
    %p166 = por %p164, %p165
    %p167 = scmp.ne.s32.totalorder %s155, %s156
    %p168 = scmp.eq.s32.totalorder %s20, 3
    %p169 = por %p167, %p168
    %p171 = scmp.ne.s32.totalorder %s156, %s170
    %p172 = scmp.eq.s32.totalorder %s20, 0
    %p173 = por %p171, %p172
    %s175 = sadd.s32 %s174, 1
    %p178 = scmp.eq.s32.totalorder %s14, 3
    %p179 = scmp.ne.s32.totalorder %s174, %s176
    %p180 = scmp.eq.s32.totalorder %s14, 0
    %p181 = por %p179, %p180
    %p182 = scmp.ne.s32.totalorder %s174, %s176
    %p183 = scmp.eq.s32.totalorder %s19, 3
    %p184 = por %p182, %p183
    %p185 = scmp.ne.s32.totalorder %s176, %s177
    %p186 = scmp.eq.s32.totalorder %s19, 0
    %p187 = por %p185, %p186
    %p188 = scmp.ne.s32.totalorder %s176, %s177
    %p189 = scmp.eq.s32.totalorder %s20, 3
    %p190 = por %p188, %p189
    %p192 = scmp.ne.s32.totalorder %s177, %s191
    %p193 = scmp.eq.s32.totalorder %s20, 0
    %p194 = por %p192, %p193
    %s195 = ssub.s32 %s14, %s21
    %p196 = scmp.eq.s32.totalorder %s195, 0
    %s198 = sadd.s32 %s197, 1
    %s199 = scalar_select %p196, %s197, %s198
    %p202 = pneg %p196
    %p203 = scmp.eq.s32.totalorder %s14, 3
    %p204 = por %p202, %p203
    %p205 = scmp.ne.s32.totalorder %s197, %s200
    %p206 = scmp.eq.s32.totalorder %s14, 0
    %p207 = por %p205, %p206
    %p208 = scmp.ne.s32.totalorder %s197, %s200
    %p209 = scmp.eq.s32.totalorder %s19, 3
    %p210 = por %p208, %p209
    %p211 = scmp.ne.s32.totalorder %s200, %s201
    %p212 = scmp.eq.s32.totalorder %s19, 0
    %p213 = por %p211, %p212
    %p214 = scmp.ne.s32.totalorder %s200, %s201
    %p215 = scmp.eq.s32.totalorder %s20, 3
    %p216 = por %p214, %p215
    %p218 = scmp.ne.s32.totalorder %s201, %s217
    %p219 = scmp.eq.s32.totalorder %s20, 0
    %p220 = por %p218, %p219
    %p221 = scmp.le.s32.totalorder 1, %s14
    %p222 = scmp.lt.s32.totalorder %s14, 5
    %p223 = pnand %p221, %p222
    %p224 = pneg %p223
    // Predicated region
    $region9: #{_forward_impl.1} parent=5 // pred_check
      _
    $region10: #{_forward_impl.1} parent=5 // pred_check_branch
      %226 = sbr.rel (%p223) target = $region12
    $region11: #{_forward_impl.1} parent=5 // pred_region
      %s227 = ssub.s32 %s14, 1
      // Predicated region
      $region13: #{_forward_impl.1} parent=11 // pred_check
        %p228 = pneg %p61
      $region14: #{_forward_impl.1} parent=11 // pred_check_branch
        %230 = sbr.rel (%p228) target = $region16
      $region15: #{_forward_impl.1} parent=11 // pred_region
        _
      $region16: #{_forward_impl.1} parent=11 // pred_fallthru
        _
      // Predicated region
      $region17: #{_forward_impl.1} parent=11 // pred_check
        %p231 = pneg %p82
      $region18: #{_forward_impl.1} parent=11 // pred_check_branch
        %233 = sbr.rel (%p231) target = $region20
      $region19: #{_forward_impl.1} parent=11 // pred_region
        _
      $region20: #{_forward_impl.1} parent=11 // pred_fallthru
        _
      // Predicated region
      $region21: #{_forward_impl.1} parent=11 // pred_check
        %p234 = pneg %p103
      $region22: #{_forward_impl.1} parent=11 // pred_check_branch
        %236 = sbr.rel (%p234) target = $region24
      $region23: #{_forward_impl.1} parent=11 // pred_region
        _
      $region24: #{_forward_impl.1} parent=11 // pred_fallthru
        _
      // Predicated region
      $region25: #{_forward_impl.1} parent=11 // pred_check
        %p237 = pneg %p124
      $region26: #{_forward_impl.1} parent=11 // pred_check_branch
        %239 = sbr.rel (%p237) target = $region28
      $region27: #{_forward_impl.1} parent=11 // pred_region
        _
      $region28: #{_forward_impl.1} parent=11 // pred_fallthru
        _
      // Predicated region
      $region29: #{_forward_impl.1} parent=11 // pred_check
        %p240 = pneg %p145
      $region30: #{_forward_impl.1} parent=11 // pred_check_branch
        %242 = sbr.rel (%p240) target = $region32
      $region31: #{_forward_impl.1} parent=11 // pred_region
        _
      $region32: #{_forward_impl.1} parent=11 // pred_fallthru
        _
      // Predicated region
      $region33: #{_forward_impl.1} parent=11 // pred_check
        %p243 = pneg %p166
      $region34: #{_forward_impl.1} parent=11 // pred_check_branch
        %245 = sbr.rel (%p243) target = $region36
      $region35: #{_forward_impl.1} parent=11 // pred_region
        _
      $region36: #{_forward_impl.1} parent=11 // pred_fallthru
        _
      // Predicated region
      $region37: #{_forward_impl.1} parent=11 // pred_check
        %p246 = pneg %p187
      $region38: #{_forward_impl.1} parent=11 // pred_check_branch
        %248 = sbr.rel (%p246) target = $region40
      $region39: #{_forward_impl.1} parent=11 // pred_region
        _
      $region40: #{_forward_impl.1} parent=11 // pred_fallthru
        _
    $region12: #{_forward_impl.1} parent=5 // pred_fallthru
      _
    %p249 = scmp.lt.s32.totalorder %s14, 4
    // Predicated region
    $region41: #{_forward_impl.1} parent=5 // pred_check
      %p250 = pneg %p249
    $region42: #{_forward_impl.1} parent=5 // pred_check_branch
      %252 = sbr.rel (%p250) target = $region44
    $region43: #{_forward_impl.1} parent=5 // pred_region
      // Predicated region
      $region45: #{_forward_impl.1} parent=43 // pred_check
        %p253 = pneg %p34
      $region46: #{_forward_impl.1} parent=43 // pred_check_branch
        %255 = sbr.rel (%p253) target = $region48
      $region47: #{_forward_impl.1} parent=43 // pred_region
        %s256 = smul.u32 4, %s14
        %p257 = scmp.lt.s32.totalorder %s256, 15
        %s258 = scalar_select %p257, %s256, 15
        %s259 = smul.addr %s258, 8
        %s260 = scalar_lea.vmem %s0, %s259
        %s261 = smul.u32 4, %s14
      $region48: #{_forward_impl.1} parent=43 // pred_fallthru
        _
    $region44: #{_forward_impl.1} parent=5 // pred_fallthru
      _
    %p262 = scmp.le.s32.totalorder 1, %s14
    %p263 = scmp.lt.s32.totalorder %s14, 5
    %p264 = pnand %p262, %p263
    %p265 = pneg %p264
    // Predicated region
    $region49: #{_forward_impl.1} parent=5 // pred_check
      _
    $region50: #{_forward_impl.1} parent=5 // pred_check_branch
      %267 = sbr.rel (%p264) target = $region52
    $region51: #{_forward_impl.1} parent=5 // pred_region
      %s268 = ssub.s32 %s14, 1
      %s269 = smul.u32 4, %s19
      %p270 = scmp.lt.s32.totalorder %s269, 15
      %s271 = scalar_select %p270, %s269, 15
      %s272 = smul.addr %s271, 8
      %s273 = scalar_lea.vmem %s0, %s272
      %p274 = pneg %p40
      %p275 = pneg %p37
      %p276 = pneg %p61
      %p277 = pneg %p58
      %p278 = pneg %p82
      %p279 = pneg %p79
      %p280 = pneg %p103
      %p281 = pneg %p100
      %p282 = pneg %p124
      %p283 = pneg %p121
      %p284 = pneg %p145
      %p285 = pneg %p142
      %p286 = pneg %p166
      %p287 = pneg %p163
      %p288 = pneg %p187
      %p289 = pneg %p184
      %p290 = pneg %p213
      %p291 = pneg %p210
      %s292 = smul.u32 32, %s19
      %p293 = scmp.lt.s32.totalorder %s292, 127
      %s294 = scalar_select %p293, %s292, 127
      %s295 = smul.addr %s294, 8
      %s296 = scalar_lea.vmem %s8, %s295
      %s297 = smul.u32 4, %s19
      %p298 = scmp.lt.s32.totalorder %s297, 15
      %s299 = scalar_select %p298, %s297, 15
      %s300 = smul.addr %s299, 8
      %s301 = scalar_lea.vmem %s0, %s300
      %s302 = smul.u32 4, %s19
      %s303 = smul.u32 32, %s19
      %p304 = scmp.lt.s32.totalorder %s303, 127
      %s305 = scalar_select %p304, %s303, 127
      %s306 = smul.addr %s305, 8
      %s307 = scalar_lea.vmem %s8, %s306
      %s308 = smul.u32 32, %s19
      %v309 = vld [vmem:[%s301] sm:$0xff]
      %v310 = vld [vmem:[%s301 + $0x8] sm:$0xff]
      %v311 = vld [vmem:[%s301 + $0x10] sm:$0xff]
      %v312 = vld [vmem:[%s301 + $0x18] sm:$0xff]
      %v313 = vld [vmem:[%s1] sm:$0xff]
      %vm314 = vcmask 64512
      %v316 = vsel %vm314, %v309, 0
      %v319 = vsel %vm314, %v310, 0
      %v322 = vsel %vm314, %v311, 0
      %v325 = vsel %vm314, %v312, 0
      %327 = vmatprep.subr.mxu0 0.0
      %328 = vmatpush1.msra.mxu0 0.0
      %329 = vmatprep.subr.mxu0 0.0
      %330 = vmatpush1.msra.mxu0 0.0
      %331 = vmatprep.subr.mxu0 0.0
      %332 = vmatpush1.msra.mxu0 0.0
      %333 = vmatprep.subr.mxu0 0.0
      %334 = vmatpush1.msra.mxu0 0.0
      %335 = vmatprep.subr.mxu0 0.0
      %336 = vmatpush1.msra.mxu0 0.0
      %337 = vmatprep.subr.mxu0 0.0
      %338 = vmatpush1.msra.mxu0 0.0
      %339 = vmatprep.subr.mxu0 0.0
      %340 = vmatpush1.msra.mxu0 0.0
      %341 = vmatprep.subr.mxu0 0.0
      %342 = vmatpush1.msra.mxu0 0.0
      %343 = vmatprep.subr.mxu0 0.0
      %344 = vmatpush1.msra.mxu0 0.0
      %345 = vmatprep.subr.mxu0 0.0
      %346 = vmatpush1.msra.mxu0 0.0
      %347 = vmatprep.subr.mxu0 0.0
      %348 = vmatpush1.msra.mxu0 0.0
      %349 = vmatprep.subr.mxu0 0.0
      %350 = vmatpush1.msra.mxu0 0.0
      %351 = vmatprep.subr.mxu0 0.0
      %352 = vmatpush1.msra.mxu0 0.0
      %353 = vmatprep.subr.mxu0 0.0
      %354 = vmatpush1.msra.mxu0 0.0
      %355 = vmatprep.subr.mxu0 0.0
      %356 = vmatpush1.msra.mxu0 0.0
      %357 = vmatprep.subr.mxu0 0.0
      %358 = vmatpush1.msra.mxu0 %v313
      %359 = vmatprep.subr.mxu0 0.0
      %360 = vmatpush2.msra.mxu0 0.0
      %361 = vmatprep.subr.mxu0 0.0
      %362 = vmatpush2.msra.mxu0 0.0
      %363 = vmatprep.subr.mxu0 0.0
      %364 = vmatpush2.msra.mxu0 0.0
      %365 = vmatprep.subr.mxu0 0.0
      %366 = vmatpush2.msra.mxu0 0.0
      %367 = vmatprep.subr.mxu0 0.0
      %368 = vmatpush2.msra.mxu0 0.0
      %369 = vmatprep.subr.mxu0 0.0
      %370 = vmatpush2.msra.mxu0 0.0
      %371 = vmatprep.subr.mxu0 0.0
      %372 = vmatpush2.msra.mxu0 0.0
      %373 = vmatprep.subr.mxu0 0.0
      %374 = vmatpush2.msra.mxu0 0.0
      %375 = vmatprep.subr.mxu0 0.0
      %376 = vmatpush2.msra.mxu0 0.0
      %377 = vmatprep.subr.mxu0 0.0
      %378 = vmatpush2.msra.mxu0 0.0
      %379 = vmatprep.subr.mxu0 0.0
      %380 = vmatpush2.msra.mxu0 0.0
      %381 = vmatprep.subr.mxu0 0.0
      %382 = vmatpush2.msra.mxu0 0.0
      %383 = vmatprep.subr.mxu0 0.0
      %384 = vmatpush2.msra.mxu0 0.0
      %385 = vmatprep.subr.mxu0 0.0
      %386 = vmatpush2.msra.mxu0 0.0
      %387 = vmatprep.subr.mxu0 0.0
      %388 = vmatpush2.msra.mxu0 0.0
      %389 = vmatprep.subr.mxu0 0.0
      %390 = vmatpush2.msra.mxu0 0.0
      %391 = vmatprep.mubr.f32.mxu0 0.0
      %392 = vmatmul.mubr.f32.gmra.mxu0 %v316
      %v393 = vpop.f32.mrf.mxu0
      %v394 = vadd.f32 0.0, %v393
      %v395 = vpop.f32.mrf.mxu0
      %396 = vmatprep.mubr.f32.mxu0 0.0
      %397 = vmatmul.mubr.f32.gmra.mxu0 %v319
      %v398 = vpop.f32.mrf.mxu0
      %v399 = vadd.f32 0.0, %v398
      %v400 = vpop.f32.mrf.mxu0
      %401 = vmatprep.mubr.f32.mxu0 0.0
      %402 = vmatmul.mubr.f32.gmra.mxu0 %v322
      %v403 = vpop.f32.mrf.mxu0
      %v404 = vadd.f32 0.0, %v403
      %v405 = vpop.f32.mrf.mxu0
      %406 = vmatprep.mubr.f32.mxu0 0.0
      %407 = vmatmul.mubr.f32.gmra.mxu0 %v325
      %v408 = vpop.f32.mrf.mxu0
      %v409 = vadd.f32 0.0, %v408
      %v410 = vpop.f32.mrf.mxu0
      %411 = vdwg.mxu0
      %v412 = vlaneseq
      %v413 = vshrl.u32 %v412, 7
      %v414 = vlaneseq
      %v415 = vand.u32 %v414, 127
      %vm416 = vcmp.lt.s32.totalorder %v415, %v413
      %v417 = vsel %vm416, 1, 0
      %v418 = vcvt.s32.f32 %v417
      %v423 = vcombine.high %v394, %v394
      %v425 = vunpack.c.l.s4 1966171168
      %v426 = vunpack.c.0.s8 %v425
      %v427 = vlaneseq
      %v428 = vshrl.u32 %v427, 7
      %v429 = vsub.s32 %v426, %v428
      %v430 = vrot.slane %v394, %v429
      %v432 = vunpack.c.l.s4 1966171168
      %v433 = vunpack.c.0.s8 %v432
      %v434 = vlaneseq
      %v435 = vshrl.u32 %v434, 7
      %v436 = vsub.s32 %v433, %v435
      %v437 = vrot.slane %v423, %v436
      %v438 = vcombine.high %v430, %v430
      %v439 = vcombine.high %v437, %v437
      %v441 = vunpack.c.l.s4 1966171168
      %v442 = vunpack.c.0.s8 %v441
      %v443 = vlaneseq
      %v444 = vshrl.u32 %v443, 7
      %v445 = vsub.s32 %v442, %v444
      %v446 = vrot.slane %v430, %v445
      %v448 = vunpack.c.l.s4 1966171168
      %v449 = vunpack.c.0.s8 %v448
      %v450 = vlaneseq
      %v451 = vshrl.u32 %v450, 7
      %v452 = vsub.s32 %v449, %v451
      %v453 = vrot.slane %v437, %v452
      %v455 = vunpack.c.l.s4 1966171168
      %v456 = vunpack.c.0.s8 %v455
      %v457 = vlaneseq
      %v458 = vshrl.u32 %v457, 7
      %v459 = vsub.s32 %v456, %v458
      %v460 = vrot.slane %v438, %v459
      %v462 = vunpack.c.l.s4 1966171168
      %v463 = vunpack.c.0.s8 %v462
      %v464 = vlaneseq
      %v465 = vshrl.u32 %v464, 7
      %v466 = vsub.s32 %v463, %v465
      %v467 = vrot.slane %v439, %v466
      %v468 = vcombine.high %v446, %v446
      %v469 = vcombine.high %v453, %v453
      %v470 = vcombine.high %v460, %v460
      %v471 = vcombine.high %v467, %v467
      %v472 = vcombine.high %v399, %v399
      %v474 = vunpack.c.l.s4 1966171168
      %v475 = vunpack.c.0.s8 %v474
      %v476 = vlaneseq
      %v477 = vshrl.u32 %v476, 7
      %v478 = vsub.s32 %v475, %v477
      %v479 = vrot.slane %v399, %v478
      %v481 = vunpack.c.l.s4 1966171168
      %v482 = vunpack.c.0.s8 %v481
      %v483 = vlaneseq
      %v484 = vshrl.u32 %v483, 7
      %v485 = vsub.s32 %v482, %v484
      %v486 = vrot.slane %v472, %v485
      %v487 = vcombine.high %v479, %v479
      %v488 = vcombine.high %v486, %v486
      %v490 = vunpack.c.l.s4 1966171168
      %v491 = vunpack.c.0.s8 %v490
      %v492 = vlaneseq
      %v493 = vshrl.u32 %v492, 7
      %v494 = vsub.s32 %v491, %v493
      %v495 = vrot.slane %v479, %v494
      %v497 = vunpack.c.l.s4 1966171168
      %v498 = vunpack.c.0.s8 %v497
      %v499 = vlaneseq
      %v500 = vshrl.u32 %v499, 7
      %v501 = vsub.s32 %v498, %v500
      %v502 = vrot.slane %v486, %v501
      %v504 = vunpack.c.l.s4 1966171168
      %v505 = vunpack.c.0.s8 %v504
      %v506 = vlaneseq
      %v507 = vshrl.u32 %v506, 7
      %v508 = vsub.s32 %v505, %v507
      %v509 = vrot.slane %v487, %v508
      %v511 = vunpack.c.l.s4 1966171168
      %v512 = vunpack.c.0.s8 %v511
      %v513 = vlaneseq
      %v514 = vshrl.u32 %v513, 7
      %v515 = vsub.s32 %v512, %v514
      %v516 = vrot.slane %v488, %v515
      %v517 = vcombine.high %v495, %v495
      %v518 = vcombine.high %v502, %v502
      %v519 = vcombine.high %v509, %v509
      %v520 = vcombine.high %v516, %v516
      %v521 = vcombine.high %v404, %v404
      %v523 = vunpack.c.l.s4 1966171168
      %v524 = vunpack.c.0.s8 %v523
      %v525 = vlaneseq
      %v526 = vshrl.u32 %v525, 7
      %v527 = vsub.s32 %v524, %v526
      %v528 = vrot.slane %v404, %v527
      %v530 = vunpack.c.l.s4 1966171168
      %v531 = vunpack.c.0.s8 %v530
      %v532 = vlaneseq
      %v533 = vshrl.u32 %v532, 7
      %v534 = vsub.s32 %v531, %v533
      %v535 = vrot.slane %v521, %v534
      %v536 = vcombine.high %v528, %v528
      %v537 = vcombine.high %v535, %v535
      %v539 = vunpack.c.l.s4 1966171168
      %v540 = vunpack.c.0.s8 %v539
      %v541 = vlaneseq
      %v542 = vshrl.u32 %v541, 7
      %v543 = vsub.s32 %v540, %v542
      %v544 = vrot.slane %v528, %v543
      %v546 = vunpack.c.l.s4 1966171168
      %v547 = vunpack.c.0.s8 %v546
      %v548 = vlaneseq
      %v549 = vshrl.u32 %v548, 7
      %v550 = vsub.s32 %v547, %v549
      %v551 = vrot.slane %v535, %v550
      %v553 = vunpack.c.l.s4 1966171168
      %v554 = vunpack.c.0.s8 %v553
      %v555 = vlaneseq
      %v556 = vshrl.u32 %v555, 7
      %v557 = vsub.s32 %v554, %v556
      %v558 = vrot.slane %v536, %v557
      %v560 = vunpack.c.l.s4 1966171168
      %v561 = vunpack.c.0.s8 %v560
      %v562 = vlaneseq
      %v563 = vshrl.u32 %v562, 7
      %v564 = vsub.s32 %v561, %v563
      %v565 = vrot.slane %v537, %v564
      %v566 = vcombine.high %v544, %v544
      %v567 = vcombine.high %v551, %v551
      %v568 = vcombine.high %v558, %v558
      %v569 = vcombine.high %v565, %v565
      %v570 = vcombine.high %v409, %v409
      %v572 = vunpack.c.l.s4 1966171168
      %v573 = vunpack.c.0.s8 %v572
      %v574 = vlaneseq
      %v575 = vshrl.u32 %v574, 7
      %v576 = vsub.s32 %v573, %v575
      %v577 = vrot.slane %v409, %v576
      %v579 = vunpack.c.l.s4 1966171168
      %v580 = vunpack.c.0.s8 %v579
      %v581 = vlaneseq
      %v582 = vshrl.u32 %v581, 7
      %v583 = vsub.s32 %v580, %v582
      %v584 = vrot.slane %v570, %v583
      %v585 = vcombine.high %v577, %v577
      %v586 = vcombine.high %v584, %v584
      %v588 = vunpack.c.l.s4 1966171168
      %v589 = vunpack.c.0.s8 %v588
      %v590 = vlaneseq
      %v591 = vshrl.u32 %v590, 7
      %v592 = vsub.s32 %v589, %v591
      %v593 = vrot.slane %v577, %v592
      %v595 = vunpack.c.l.s4 1966171168
      %v596 = vunpack.c.0.s8 %v595
      %v597 = vlaneseq
      %v598 = vshrl.u32 %v597, 7
      %v599 = vsub.s32 %v596, %v598
      %v600 = vrot.slane %v584, %v599
      %v602 = vunpack.c.l.s4 1966171168
      %v603 = vunpack.c.0.s8 %v602
      %v604 = vlaneseq
      %v605 = vshrl.u32 %v604, 7
      %v606 = vsub.s32 %v603, %v605
      %v607 = vrot.slane %v585, %v606
      %v609 = vunpack.c.l.s4 1966171168
      %v610 = vunpack.c.0.s8 %v609
      %v611 = vlaneseq
      %v612 = vshrl.u32 %v611, 7
      %v613 = vsub.s32 %v610, %v612
      %v614 = vrot.slane %v586, %v613
      %v615 = vcombine.high %v593, %v593
      %v616 = vcombine.high %v600, %v600
      %v617 = vcombine.high %v607, %v607
      %v618 = vcombine.high %v614, %v614
      %v619 = vlaneseq
      %v620 = vshrl.u32 %v619, 7
      %v621 = vsub.s32 0, %v620
      %v622 = vrot.slane %v446, %v621
      %v623 = vlaneseq
      %v624 = vshrl.u32 %v623, 7
      %v625 = vsub.s32 0, %v624
      %v626 = vrot.slane %v460, %v625
      %v627 = vlaneseq
      %v628 = vshrl.u32 %v627, 7
      %v629 = vsub.s32 0, %v628
      %v630 = vrot.slane %v468, %v629
      %v631 = vlaneseq
      %v632 = vshrl.u32 %v631, 7
      %v633 = vsub.s32 0, %v632
      %v634 = vrot.slane %v470, %v633
      %v635 = vlaneseq
      %v636 = vshrl.u32 %v635, 7
      %v637 = vsub.s32 0, %v636
      %v638 = vrot.slane %v453, %v637
      %v639 = vlaneseq
      %v640 = vshrl.u32 %v639, 7
      %v641 = vsub.s32 0, %v640
      %v642 = vrot.slane %v467, %v641
      %v643 = vlaneseq
      %v644 = vshrl.u32 %v643, 7
      %v645 = vsub.s32 0, %v644
      %v646 = vrot.slane %v469, %v645
      %v647 = vlaneseq
      %v648 = vshrl.u32 %v647, 7
      %v649 = vsub.s32 0, %v648
      %v650 = vrot.slane %v471, %v649
      %v651 = vlaneseq
      %v652 = vshrl.u32 %v651, 7
      %v653 = vsub.s32 0, %v652
      %v654 = vrot.slane %v495, %v653
      %v655 = vlaneseq
      %v656 = vshrl.u32 %v655, 7
      %v657 = vsub.s32 0, %v656
      %v658 = vrot.slane %v509, %v657
      %v659 = vlaneseq
      %v660 = vshrl.u32 %v659, 7
      %v661 = vsub.s32 0, %v660
      %v662 = vrot.slane %v517, %v661
      %v663 = vlaneseq
      %v664 = vshrl.u32 %v663, 7
      %v665 = vsub.s32 0, %v664
      %v666 = vrot.slane %v519, %v665
      %v667 = vlaneseq
      %v668 = vshrl.u32 %v667, 7
      %v669 = vsub.s32 0, %v668
      %v670 = vrot.slane %v502, %v669
      %v671 = vlaneseq
      %v672 = vshrl.u32 %v671, 7
      %v673 = vsub.s32 0, %v672
      %v674 = vrot.slane %v516, %v673
      %v675 = vlaneseq
      %v676 = vshrl.u32 %v675, 7
      %v677 = vsub.s32 0, %v676
      %v678 = vrot.slane %v518, %v677
      %v679 = vlaneseq
      %v680 = vshrl.u32 %v679, 7
      %v681 = vsub.s32 0, %v680
      %v682 = vrot.slane %v520, %v681
      %v683 = vlaneseq
      %v684 = vshrl.u32 %v683, 7
      %v685 = vsub.s32 0, %v684
      %v686 = vrot.slane %v544, %v685
      %v687 = vlaneseq
      %v688 = vshrl.u32 %v687, 7
      %v689 = vsub.s32 0, %v688
      %v690 = vrot.slane %v558, %v689
      %v691 = vlaneseq
      %v692 = vshrl.u32 %v691, 7
      %v693 = vsub.s32 0, %v692
      %v694 = vrot.slane %v566, %v693
      %v695 = vlaneseq
      %v696 = vshrl.u32 %v695, 7
      %v697 = vsub.s32 0, %v696
      %v698 = vrot.slane %v568, %v697
      %v699 = vlaneseq
      %v700 = vshrl.u32 %v699, 7
      %v701 = vsub.s32 0, %v700
      %v702 = vrot.slane %v551, %v701
      %v703 = vlaneseq
      %v704 = vshrl.u32 %v703, 7
      %v705 = vsub.s32 0, %v704
      %v706 = vrot.slane %v565, %v705
      %v707 = vlaneseq
      %v708 = vshrl.u32 %v707, 7
      %v709 = vsub.s32 0, %v708
      %v710 = vrot.slane %v567, %v709
      %v711 = vlaneseq
      %v712 = vshrl.u32 %v711, 7
      %v713 = vsub.s32 0, %v712
      %v714 = vrot.slane %v569, %v713
      %v715 = vlaneseq
      %v716 = vshrl.u32 %v715, 7
      %v717 = vsub.s32 0, %v716
      %v718 = vrot.slane %v593, %v717
      %v719 = vlaneseq
      %v720 = vshrl.u32 %v719, 7
      %v721 = vsub.s32 0, %v720
      %v722 = vrot.slane %v607, %v721
      %v723 = vlaneseq
      %v724 = vshrl.u32 %v723, 7
      %v725 = vsub.s32 0, %v724
      %v726 = vrot.slane %v615, %v725
      %v727 = vlaneseq
      %v728 = vshrl.u32 %v727, 7
      %v729 = vsub.s32 0, %v728
      %v730 = vrot.slane %v617, %v729
      %v731 = vlaneseq
      %v732 = vshrl.u32 %v731, 7
      %v733 = vsub.s32 0, %v732
      %v734 = vrot.slane %v600, %v733
      %v735 = vlaneseq
      %v736 = vshrl.u32 %v735, 7
      %v737 = vsub.s32 0, %v736
      %v738 = vrot.slane %v614, %v737
      %v739 = vlaneseq
      %v740 = vshrl.u32 %v739, 7
      %v741 = vsub.s32 0, %v740
      %v742 = vrot.slane %v616, %v741
      %v743 = vlaneseq
      %v744 = vshrl.u32 %v743, 7
      %v745 = vsub.s32 0, %v744
      %v746 = vrot.slane %v618, %v745
      %v779 = vmul.f32 %v622, %v418
      %v780 = vmul.f32 %v626, %v418
      %v781 = vmul.f32 %v630, %v418
      %v782 = vmul.f32 %v634, %v418
      %v783 = vmul.f32 %v638, %v418
      %v784 = vmul.f32 %v642, %v418
      %v785 = vmul.f32 %v646, %v418
      %v786 = vmul.f32 %v650, %v418
      %v787 = vmul.f32 %v654, %v418
      %v788 = vmul.f32 %v658, %v418
      %v789 = vmul.f32 %v662, %v418
      %v790 = vmul.f32 %v666, %v418
      %v791 = vmul.f32 %v670, %v418
      %v792 = vmul.f32 %v674, %v418
      %v793 = vmul.f32 %v678, %v418
      %v794 = vmul.f32 %v682, %v418
      %v795 = vmul.f32 %v686, %v418
      %v796 = vmul.f32 %v690, %v418
      %v797 = vmul.f32 %v694, %v418
      %v798 = vmul.f32 %v698, %v418
      %v799 = vmul.f32 %v702, %v418
      %v800 = vmul.f32 %v706, %v418
      %v801 = vmul.f32 %v710, %v418
      %v802 = vmul.f32 %v714, %v418
      %v803 = vmul.f32 %v718, %v418
      %v804 = vmul.f32 %v722, %v418
      %v805 = vmul.f32 %v726, %v418
      %v806 = vmul.f32 %v730, %v418
      %v807 = vmul.f32 %v734, %v418
      %v808 = vmul.f32 %v738, %v418
      %v809 = vmul.f32 %v742, %v418
      %v810 = vmul.f32 %v746, %v418
      %v811 = vld [vmem:[%s2] sm:$0xff]
      %v812 = vld [vmem:[%s3] sm:$0x1]
      %v814 = vlaneseq
      %v815 = vshrl.u32 %v814, 7
      %v816 = vsub.s32 0, %v815
      %v817 = vrot.slane %v812, %v816
      %v820 = vsel %vm314, %v779, 0
      %v823 = vsel %vm314, %v780, 0
      %v826 = vsel %vm314, %v781, 0
      %v829 = vsel %vm314, %v782, 0
      %v832 = vsel %vm314, %v783, 0
      %v835 = vsel %vm314, %v784, 0
      %v838 = vsel %vm314, %v785, 0
      %v841 = vsel %vm314, %v786, 0
      %v844 = vsel %vm314, %v787, 0
      %v847 = vsel %vm314, %v788, 0
      %v850 = vsel %vm314, %v789, 0
      %v853 = vsel %vm314, %v790, 0
      %v856 = vsel %vm314, %v791, 0
      %v859 = vsel %vm314, %v792, 0
      %v862 = vsel %vm314, %v793, 0
      %v865 = vsel %vm314, %v794, 0
      %v868 = vsel %vm314, %v795, 0
      %v871 = vsel %vm314, %v796, 0
      %v874 = vsel %vm314, %v797, 0
      %v877 = vsel %vm314, %v798, 0
      %v880 = vsel %vm314, %v799, 0
      %v883 = vsel %vm314, %v800, 0
      %v886 = vsel %vm314, %v801, 0
      %v889 = vsel %vm314, %v802, 0
      %v892 = vsel %vm314, %v803, 0
      %v895 = vsel %vm314, %v804, 0
      %v898 = vsel %vm314, %v805, 0
      %v901 = vsel %vm314, %v806, 0
      %v904 = vsel %vm314, %v807, 0
      %v907 = vsel %vm314, %v808, 0
      %v910 = vsel %vm314, %v809, 0
      %v913 = vsel %vm314, %v810, 0
      %915 = vmatprep.subr.mxu0 0.0
      %916 = vmatpush1.msra.mxu0 0.0
      %917 = vmatprep.subr.mxu0 0.0
      %918 = vmatpush1.msra.mxu0 0.0
      %919 = vmatprep.subr.mxu0 0.0
      %920 = vmatpush1.msra.mxu0 0.0
      %921 = vmatprep.subr.mxu0 0.0
      %922 = vmatpush1.msra.mxu0 0.0
      %923 = vmatprep.subr.mxu0 0.0
      %924 = vmatpush1.msra.mxu0 0.0
      %925 = vmatprep.subr.mxu0 0.0
      %926 = vmatpush1.msra.mxu0 0.0
      %927 = vmatprep.subr.mxu0 0.0
      %928 = vmatpush1.msra.mxu0 0.0
      %929 = vmatprep.subr.mxu0 0.0
      %930 = vmatpush1.msra.mxu0 0.0
      %931 = vmatprep.subr.mxu0 0.0
      %932 = vmatpush1.msra.mxu0 0.0
      %933 = vmatprep.subr.mxu0 0.0
      %934 = vmatpush1.msra.mxu0 0.0
      %935 = vmatprep.subr.mxu0 0.0
      %936 = vmatpush1.msra.mxu0 0.0
      %937 = vmatprep.subr.mxu0 0.0
      %938 = vmatpush1.msra.mxu0 0.0
      %939 = vmatprep.subr.mxu0 0.0
      %940 = vmatpush1.msra.mxu0 0.0
      %941 = vmatprep.subr.mxu0 0.0
      %942 = vmatpush1.msra.mxu0 0.0
      %943 = vmatprep.subr.mxu0 0.0
      %944 = vmatpush1.msra.mxu0 0.0
      %945 = vmatprep.subr.mxu0 0.0
      %946 = vmatpush1.msra.mxu0 %v811
      %947 = vmatprep.subr.mxu0 0.0
      %948 = vmatpush2.msra.mxu0 0.0
      %949 = vmatprep.subr.mxu0 0.0
      %950 = vmatpush2.msra.mxu0 0.0
      %951 = vmatprep.subr.mxu0 0.0
      %952 = vmatpush2.msra.mxu0 0.0
      %953 = vmatprep.subr.mxu0 0.0
      %954 = vmatpush2.msra.mxu0 0.0
      %955 = vmatprep.subr.mxu0 0.0
      %956 = vmatpush2.msra.mxu0 0.0
      %957 = vmatprep.subr.mxu0 0.0
      %958 = vmatpush2.msra.mxu0 0.0
      %959 = vmatprep.subr.mxu0 0.0
      %960 = vmatpush2.msra.mxu0 0.0
      %961 = vmatprep.subr.mxu0 0.0
      %962 = vmatpush2.msra.mxu0 0.0
      %963 = vmatprep.subr.mxu0 0.0
      %964 = vmatpush2.msra.mxu0 0.0
      %965 = vmatprep.subr.mxu0 0.0
      %966 = vmatpush2.msra.mxu0 0.0
      %967 = vmatprep.subr.mxu0 0.0
      %968 = vmatpush2.msra.mxu0 0.0
      %969 = vmatprep.subr.mxu0 0.0
      %970 = vmatpush2.msra.mxu0 0.0
      %971 = vmatprep.subr.mxu0 0.0
      %972 = vmatpush2.msra.mxu0 0.0
      %973 = vmatprep.subr.mxu0 0.0
      %974 = vmatpush2.msra.mxu0 0.0
      %975 = vmatprep.subr.mxu0 0.0
      %976 = vmatpush2.msra.mxu0 0.0
      %977 = vmatprep.subr.mxu0 0.0
      %978 = vmatpush2.msra.mxu0 0.0
      %979 = vmatprep.mubr.f32.mxu0 0.0
      %980 = vmatmul.mubr.f32.gmra.mxu0 %v820
      %v981 = vpop.f32.mrf.mxu0
      %v982 = vadd.f32 %v817, %v981
      %v983 = vpop.f32.mrf.mxu0
      %984 = vmatprep.mubr.f32.mxu0 0.0
      %985 = vmatmul.mubr.f32.gmra.mxu0 %v823
      %v986 = vpop.f32.mrf.mxu0
      %v987 = vadd.f32 %v817, %v986
      %v988 = vpop.f32.mrf.mxu0
      %989 = vmatprep.mubr.f32.mxu0 0.0
      %990 = vmatmul.mubr.f32.gmra.mxu0 %v826
      %v991 = vpop.f32.mrf.mxu0
      %v992 = vadd.f32 %v817, %v991
      %v993 = vpop.f32.mrf.mxu0
      %994 = vmatprep.mubr.f32.mxu0 0.0
      %995 = vmatmul.mubr.f32.gmra.mxu0 %v829
      %v996 = vpop.f32.mrf.mxu0
      %v997 = vadd.f32 %v817, %v996
      %v998 = vpop.f32.mrf.mxu0
      %999 = vmatprep.mubr.f32.mxu0 0.0
      %1000 = vmatmul.mubr.f32.gmra.mxu0 %v832
      %v1001 = vpop.f32.mrf.mxu0
      %v1002 = vadd.f32 %v817, %v1001
      %v1003 = vpop.f32.mrf.mxu0
      %1004 = vmatprep.mubr.f32.mxu0 0.0
      %1005 = vmatmul.mubr.f32.gmra.mxu0 %v835
      %v1006 = vpop.f32.mrf.mxu0
      %v1007 = vadd.f32 %v817, %v1006
      %v1008 = vpop.f32.mrf.mxu0
      %1009 = vmatprep.mubr.f32.mxu0 0.0
      %1010 = vmatmul.mubr.f32.gmra.mxu0 %v838
      %v1011 = vpop.f32.mrf.mxu0
      %v1012 = vadd.f32 %v817, %v1011
      %v1013 = vpop.f32.mrf.mxu0
      %1014 = vmatprep.mubr.f32.mxu0 0.0
      %1015 = vmatmul.mubr.f32.gmra.mxu0 %v841
      %v1016 = vpop.f32.mrf.mxu0
      %v1017 = vadd.f32 %v817, %v1016
      %v1018 = vpop.f32.mrf.mxu0
      %1019 = vmatprep.mubr.f32.mxu0 0.0
      %1020 = vmatmul.mubr.f32.gmra.mxu0 %v844
      %v1021 = vpop.f32.mrf.mxu0
      %v1022 = vadd.f32 %v817, %v1021
      %v1023 = vpop.f32.mrf.mxu0
      %1024 = vmatprep.mubr.f32.mxu0 0.0
      %1025 = vmatmul.mubr.f32.gmra.mxu0 %v847
      %v1026 = vpop.f32.mrf.mxu0
      %v1027 = vadd.f32 %v817, %v1026
      %v1028 = vpop.f32.mrf.mxu0
      %1029 = vmatprep.mubr.f32.mxu0 0.0
      %1030 = vmatmul.mubr.f32.gmra.mxu0 %v850
      %v1031 = vpop.f32.mrf.mxu0
      %v1032 = vadd.f32 %v817, %v1031
      %v1033 = vpop.f32.mrf.mxu0
      %1034 = vmatprep.mubr.f32.mxu0 0.0
      %1035 = vmatmul.mubr.f32.gmra.mxu0 %v853
      %v1036 = vpop.f32.mrf.mxu0
      %v1037 = vadd.f32 %v817, %v1036
      %v1038 = vpop.f32.mrf.mxu0
      %1039 = vmatprep.mubr.f32.mxu0 0.0
      %1040 = vmatmul.mubr.f32.gmra.mxu0 %v856
      %v1041 = vpop.f32.mrf.mxu0
      %v1042 = vadd.f32 %v817, %v1041
      %v1043 = vpop.f32.mrf.mxu0
      %1044 = vmatprep.mubr.f32.mxu0 0.0
      %1045 = vmatmul.mubr.f32.gmra.mxu0 %v859
      %v1046 = vpop.f32.mrf.mxu0
      %v1047 = vadd.f32 %v817, %v1046
      %v1048 = vpop.f32.mrf.mxu0
      %1049 = vmatprep.mubr.f32.mxu0 0.0
      %1050 = vmatmul.mubr.f32.gmra.mxu0 %v862
      %v1051 = vpop.f32.mrf.mxu0
      %v1052 = vadd.f32 %v817, %v1051
      %v1053 = vpop.f32.mrf.mxu0
      %1054 = vmatprep.mubr.f32.mxu0 0.0
      %1055 = vmatmul.mubr.f32.gmra.mxu0 %v865
      %v1056 = vpop.f32.mrf.mxu0
      %v1057 = vadd.f32 %v817, %v1056
      %v1058 = vpop.f32.mrf.mxu0
      %1059 = vmatprep.mubr.f32.mxu0 0.0
      %1060 = vmatmul.mubr.f32.gmra.mxu0 %v868
      %v1061 = vpop.f32.mrf.mxu0
      %v1062 = vadd.f32 %v817, %v1061
      %v1063 = vpop.f32.mrf.mxu0
      %1064 = vmatprep.mubr.f32.mxu0 0.0
      %1065 = vmatmul.mubr.f32.gmra.mxu0 %v871
      %v1066 = vpop.f32.mrf.mxu0
      %v1067 = vadd.f32 %v817, %v1066
      %v1068 = vpop.f32.mrf.mxu0
      %1069 = vmatprep.mubr.f32.mxu0 0.0
      %1070 = vmatmul.mubr.f32.gmra.mxu0 %v874
      %v1071 = vpop.f32.mrf.mxu0
      %v1072 = vadd.f32 %v817, %v1071
      %v1073 = vpop.f32.mrf.mxu0
      %1074 = vmatprep.mubr.f32.mxu0 0.0
      %1075 = vmatmul.mubr.f32.gmra.mxu0 %v877
      %v1076 = vpop.f32.mrf.mxu0
      %v1077 = vadd.f32 %v817, %v1076
      %v1078 = vpop.f32.mrf.mxu0
      %1079 = vmatprep.mubr.f32.mxu0 0.0
      %1080 = vmatmul.mubr.f32.gmra.mxu0 %v880
      %v1081 = vpop.f32.mrf.mxu0
      %v1082 = vadd.f32 %v817, %v1081
      %v1083 = vpop.f32.mrf.mxu0
      %1084 = vmatprep.mubr.f32.mxu0 0.0
      %1085 = vmatmul.mubr.f32.gmra.mxu0 %v883
      %v1086 = vpop.f32.mrf.mxu0
      %v1087 = vadd.f32 %v817, %v1086
      %v1088 = vpop.f32.mrf.mxu0
      %1089 = vmatprep.mubr.f32.mxu0 0.0
      %1090 = vmatmul.mubr.f32.gmra.mxu0 %v886
      %v1091 = vpop.f32.mrf.mxu0
      %v1092 = vadd.f32 %v817, %v1091
      %v1093 = vpop.f32.mrf.mxu0
      %1094 = vmatprep.mubr.f32.mxu0 0.0
      %1095 = vmatmul.mubr.f32.gmra.mxu0 %v889
      %v1096 = vpop.f32.mrf.mxu0
      %v1097 = vadd.f32 %v817, %v1096
      %v1098 = vpop.f32.mrf.mxu0
      %1099 = vmatprep.mubr.f32.mxu0 0.0
      %1100 = vmatmul.mubr.f32.gmra.mxu0 %v892
      %v1101 = vpop.f32.mrf.mxu0
      %v1102 = vadd.f32 %v817, %v1101
      %v1103 = vpop.f32.mrf.mxu0
      %1104 = vmatprep.mubr.f32.mxu0 0.0
      %1105 = vmatmul.mubr.f32.gmra.mxu0 %v895
      %v1106 = vpop.f32.mrf.mxu0
      %v1107 = vadd.f32 %v817, %v1106
      %v1108 = vpop.f32.mrf.mxu0
      %1109 = vmatprep.mubr.f32.mxu0 0.0
      %1110 = vmatmul.mubr.f32.gmra.mxu0 %v898
      %v1111 = vpop.f32.mrf.mxu0
      %v1112 = vadd.f32 %v817, %v1111
      %v1113 = vpop.f32.mrf.mxu0
      %1114 = vmatprep.mubr.f32.mxu0 0.0
      %1115 = vmatmul.mubr.f32.gmra.mxu0 %v901
      %v1116 = vpop.f32.mrf.mxu0
      %v1117 = vadd.f32 %v817, %v1116
      %v1118 = vpop.f32.mrf.mxu0
      %1119 = vmatprep.mubr.f32.mxu0 0.0
      %1120 = vmatmul.mubr.f32.gmra.mxu0 %v904
      %v1121 = vpop.f32.mrf.mxu0
      %v1122 = vadd.f32 %v817, %v1121
      %v1123 = vpop.f32.mrf.mxu0
      %1124 = vmatprep.mubr.f32.mxu0 0.0
      %1125 = vmatmul.mubr.f32.gmra.mxu0 %v907
      %v1126 = vpop.f32.mrf.mxu0
      %v1127 = vadd.f32 %v817, %v1126
      %v1128 = vpop.f32.mrf.mxu0
      %1129 = vmatprep.mubr.f32.mxu0 0.0
      %1130 = vmatmul.mubr.f32.gmra.mxu0 %v910
      %v1131 = vpop.f32.mrf.mxu0
      %v1132 = vadd.f32 %v817, %v1131
      %v1133 = vpop.f32.mrf.mxu0
      %1134 = vmatprep.mubr.f32.mxu0 0.0
      %1135 = vmatmul.mubr.f32.gmra.mxu0 %v913
      %v1136 = vpop.f32.mrf.mxu0
      %v1137 = vadd.f32 %v817, %v1136
      %v1138 = vpop.f32.mrf.mxu0
      %1139 = vdwg.mxu0
      %v1140 = vmax.f32 %v982, 0.0
      %v1141 = vmax.f32 %v987, 0.0
      %v1142 = vmax.f32 %v992, 0.0
      %v1143 = vmax.f32 %v997, 0.0
      %v1144 = vmax.f32 %v1002, 0.0
      %v1145 = vmax.f32 %v1007, 0.0
      %v1146 = vmax.f32 %v1012, 0.0
      %v1147 = vmax.f32 %v1017, 0.0
      %v1148 = vmax.f32 %v1022, 0.0
      %v1149 = vmax.f32 %v1027, 0.0
      %v1150 = vmax.f32 %v1032, 0.0
      %v1151 = vmax.f32 %v1037, 0.0
      %v1152 = vmax.f32 %v1042, 0.0
      %v1153 = vmax.f32 %v1047, 0.0
      %v1154 = vmax.f32 %v1052, 0.0
      %v1155 = vmax.f32 %v1057, 0.0
      %v1156 = vmax.f32 %v1062, 0.0
      %v1157 = vmax.f32 %v1067, 0.0
      %v1158 = vmax.f32 %v1072, 0.0
      %v1159 = vmax.f32 %v1077, 0.0
      %v1160 = vmax.f32 %v1082, 0.0
      %v1161 = vmax.f32 %v1087, 0.0
      %v1162 = vmax.f32 %v1092, 0.0
      %v1163 = vmax.f32 %v1097, 0.0
      %v1164 = vmax.f32 %v1102, 0.0
      %v1165 = vmax.f32 %v1107, 0.0
      %v1166 = vmax.f32 %v1112, 0.0
      %v1167 = vmax.f32 %v1117, 0.0
      %v1168 = vmax.f32 %v1122, 0.0
      %v1169 = vmax.f32 %v1127, 0.0
      %v1170 = vmax.f32 %v1132, 0.0
      %v1171 = vmax.f32 %v1137, 0.0
      %v1172 = vld [vmem:[%s4] sm:$0xff]
      %v1173 = vld [vmem:[%s4 + $0x8] sm:$0xff]
      %v1174 = vld [vmem:[%s4 + $0x10] sm:$0xff]
      %v1175 = vld [vmem:[%s4 + $0x18] sm:$0xff]
      %v1176 = vld [vmem:[%s5] sm:$0x1]
      %v1178 = vlaneseq
      %v1179 = vshrl.u32 %v1178, 7
      %v1180 = vsub.s32 0, %v1179
      %v1181 = vrot.slane %v1176, %v1180
      %vm1183 = vcmask 261120
      %v1185 = vsel %vm1183, %v1140, 0
      %v1188 = vsel %vm1183, %v1141, 0
      %v1191 = vsel %vm1183, %v1142, 0
      %v1194 = vsel %vm1183, %v1143, 0
      %v1197 = vsel %vm1183, %v1144, 0
      %v1200 = vsel %vm1183, %v1145, 0
      %v1203 = vsel %vm1183, %v1146, 0
      %v1206 = vsel %vm1183, %v1147, 0
      %v1209 = vsel %vm1183, %v1148, 0
      %v1212 = vsel %vm1183, %v1149, 0
      %v1215 = vsel %vm1183, %v1150, 0
      %v1218 = vsel %vm1183, %v1151, 0
      %v1221 = vsel %vm1183, %v1152, 0
      %v1224 = vsel %vm1183, %v1153, 0
      %v1227 = vsel %vm1183, %v1154, 0
      %v1230 = vsel %vm1183, %v1155, 0
      %v1233 = vsel %vm1183, %v1156, 0
      %v1236 = vsel %vm1183, %v1157, 0
      %v1239 = vsel %vm1183, %v1158, 0
      %v1242 = vsel %vm1183, %v1159, 0
      %v1245 = vsel %vm1183, %v1160, 0
      %v1248 = vsel %vm1183, %v1161, 0
      %v1251 = vsel %vm1183, %v1162, 0
      %v1254 = vsel %vm1183, %v1163, 0
      %v1257 = vsel %vm1183, %v1164, 0
      %v1260 = vsel %vm1183, %v1165, 0
      %v1263 = vsel %vm1183, %v1166, 0
      %v1266 = vsel %vm1183, %v1167, 0
      %v1269 = vsel %vm1183, %v1168, 0
      %v1272 = vsel %vm1183, %v1169, 0
      %v1275 = vsel %vm1183, %v1170, 0
      %v1278 = vsel %vm1183, %v1171, 0
      %1280 = vmatprep.subr.mxu0 0.0
      %1281 = vmatpush1.msra.mxu0 0.0
      %1282 = vmatprep.subr.mxu0 0.0
      %1283 = vmatpush1.msra.mxu0 0.0
      %1284 = vmatprep.subr.mxu0 0.0
      %1285 = vmatpush1.msra.mxu0 0.0
      %1286 = vmatprep.subr.mxu0 0.0
      %1287 = vmatpush1.msra.mxu0 0.0
      %1288 = vmatprep.subr.mxu0 0.0
      %1289 = vmatpush1.msra.mxu0 0.0
      %1290 = vmatprep.subr.mxu0 0.0
      %1291 = vmatpush1.msra.mxu0 0.0
      %1292 = vmatprep.subr.mxu0 0.0
      %1293 = vmatpush1.msra.mxu0 0.0
      %1294 = vmatprep.subr.mxu0 0.0
      %1295 = vmatpush1.msra.mxu0 0.0
      %1296 = vmatprep.subr.mxu0 0.0
      %1297 = vmatpush1.msra.mxu0 0.0
      %1298 = vmatprep.subr.mxu0 0.0
      %1299 = vmatpush1.msra.mxu0 0.0
      %1300 = vmatprep.subr.mxu0 0.0
      %1301 = vmatpush1.msra.mxu0 0.0
      %1302 = vmatprep.subr.mxu0 0.0
      %1303 = vmatpush1.msra.mxu0 0.0
      %1304 = vmatprep.subr.mxu0 0.0
      %1305 = vmatpush1.msra.mxu0 %v1175
      %1306 = vmatprep.subr.mxu0 0.0
      %1307 = vmatpush1.msra.mxu0 %v1174
      %1308 = vmatprep.subr.mxu0 0.0
      %1309 = vmatpush1.msra.mxu0 %v1173
      %1310 = vmatprep.subr.mxu0 0.0
      %1311 = vmatpush1.msra.mxu0 %v1172
      %1312 = vmatprep.subr.mxu0 0.0
      %1313 = vmatpush2.msra.mxu0 0.0
      %1314 = vmatprep.subr.mxu0 0.0
      %1315 = vmatpush2.msra.mxu0 0.0
      %1316 = vmatprep.subr.mxu0 0.0
      %1317 = vmatpush2.msra.mxu0 0.0
      %1318 = vmatprep.subr.mxu0 0.0
      %1319 = vmatpush2.msra.mxu0 0.0
      %1320 = vmatprep.subr.mxu0 0.0
      %1321 = vmatpush2.msra.mxu0 0.0
      %1322 = vmatprep.subr.mxu0 0.0
      %1323 = vmatpush2.msra.mxu0 0.0
      %1324 = vmatprep.subr.mxu0 0.0
      %1325 = vmatpush2.msra.mxu0 0.0
      %1326 = vmatprep.subr.mxu0 0.0
      %1327 = vmatpush2.msra.mxu0 0.0
      %1328 = vmatprep.subr.mxu0 0.0
      %1329 = vmatpush2.msra.mxu0 0.0
      %1330 = vmatprep.subr.mxu0 0.0
      %1331 = vmatpush2.msra.mxu0 0.0
      %1332 = vmatprep.subr.mxu0 0.0
      %1333 = vmatpush2.msra.mxu0 0.0
      %1334 = vmatprep.subr.mxu0 0.0
      %1335 = vmatpush2.msra.mxu0 0.0
      %1336 = vmatprep.subr.mxu0 0.0
      %1337 = vmatpush2.msra.mxu0 0.0
      %1338 = vmatprep.subr.mxu0 0.0
      %1339 = vmatpush2.msra.mxu0 0.0
      %1340 = vmatprep.subr.mxu0 0.0
      %1341 = vmatpush2.msra.mxu0 0.0
      %1342 = vmatprep.subr.mxu0 0.0
      %1343 = vmatpush2.msra.mxu0 0.0
      %1344 = vmatprep.mubr.f32.mxu0 0.0
      %1345 = vmatmul.mubr.f32.gmra.mxu0 %v1185
      %v1346 = vpop.f32.mrf.mxu0
      %v1347 = vadd.f32 %v1181, %v1346
      %v1348 = vpop.f32.mrf.mxu0
      %1349 = vmatprep.mubr.f32.mxu0 0.0
      %1350 = vmatmul.mubr.f32.gmra.mxu0 %v1188
      %v1351 = vpop.f32.mrf.mxu0
      %v1352 = vadd.f32 %v1181, %v1351
      %v1353 = vpop.f32.mrf.mxu0
      %1354 = vmatprep.mubr.f32.mxu0 0.0
      %1355 = vmatmul.mubr.f32.gmra.mxu0 %v1191
      %v1356 = vpop.f32.mrf.mxu0
      %v1357 = vadd.f32 %v1181, %v1356
      %v1358 = vpop.f32.mrf.mxu0
      %1359 = vmatprep.mubr.f32.mxu0 0.0
      %1360 = vmatmul.mubr.f32.gmra.mxu0 %v1194
      %v1361 = vpop.f32.mrf.mxu0
      %v1362 = vadd.f32 %v1181, %v1361
      %v1363 = vpop.f32.mrf.mxu0
      %1364 = vmatprep.mubr.f32.mxu0 0.0
      %1365 = vmatmul.mubr.f32.gmra.mxu0 %v1197
      %v1366 = vpop.f32.mrf.mxu0
      %v1367 = vadd.f32 %v1181, %v1366
      %v1368 = vpop.f32.mrf.mxu0
      %1369 = vmatprep.mubr.f32.mxu0 0.0
      %1370 = vmatmul.mubr.f32.gmra.mxu0 %v1200
      %v1371 = vpop.f32.mrf.mxu0
      %v1372 = vadd.f32 %v1181, %v1371
      %v1373 = vpop.f32.mrf.mxu0
      %1374 = vmatprep.mubr.f32.mxu0 0.0
      %1375 = vmatmul.mubr.f32.gmra.mxu0 %v1203
      %v1376 = vpop.f32.mrf.mxu0
      %v1377 = vadd.f32 %v1181, %v1376
      %v1378 = vpop.f32.mrf.mxu0
      %1379 = vmatprep.mubr.f32.mxu0 0.0
      %1380 = vmatmul.mubr.f32.gmra.mxu0 %v1206
      %v1381 = vpop.f32.mrf.mxu0
      %v1382 = vadd.f32 %v1181, %v1381
      %v1383 = vpop.f32.mrf.mxu0
      %1384 = vmatprep.mubr.f32.mxu0 0.0
      %1385 = vmatmul.mubr.f32.gmra.mxu0 %v1209
      %v1386 = vpop.f32.mrf.mxu0
      %v1387 = vadd.f32 %v1181, %v1386
      %v1388 = vpop.f32.mrf.mxu0
      %1389 = vmatprep.mubr.f32.mxu0 0.0
      %1390 = vmatmul.mubr.f32.gmra.mxu0 %v1212
      %v1391 = vpop.f32.mrf.mxu0
      %v1392 = vadd.f32 %v1181, %v1391
      %v1393 = vpop.f32.mrf.mxu0
      %1394 = vmatprep.mubr.f32.mxu0 0.0
      %1395 = vmatmul.mubr.f32.gmra.mxu0 %v1215
      %v1396 = vpop.f32.mrf.mxu0
      %v1397 = vadd.f32 %v1181, %v1396
      %v1398 = vpop.f32.mrf.mxu0
      %1399 = vmatprep.mubr.f32.mxu0 0.0
      %1400 = vmatmul.mubr.f32.gmra.mxu0 %v1218
      %v1401 = vpop.f32.mrf.mxu0
      %v1402 = vadd.f32 %v1181, %v1401
      %v1403 = vpop.f32.mrf.mxu0
      %1404 = vmatprep.mubr.f32.mxu0 0.0
      %1405 = vmatmul.mubr.f32.gmra.mxu0 %v1221
      %v1406 = vpop.f32.mrf.mxu0
      %v1407 = vadd.f32 %v1181, %v1406
      %v1408 = vpop.f32.mrf.mxu0
      %1409 = vmatprep.mubr.f32.mxu0 0.0
      %1410 = vmatmul.mubr.f32.gmra.mxu0 %v1224
      %v1411 = vpop.f32.mrf.mxu0
      %v1412 = vadd.f32 %v1181, %v1411
      %v1413 = vpop.f32.mrf.mxu0
      %1414 = vmatprep.mubr.f32.mxu0 0.0
      %1415 = vmatmul.mubr.f32.gmra.mxu0 %v1227
      %v1416 = vpop.f32.mrf.mxu0
      %v1417 = vadd.f32 %v1181, %v1416
      %v1418 = vpop.f32.mrf.mxu0
      %1419 = vmatprep.mubr.f32.mxu0 0.0
      %1420 = vmatmul.mubr.f32.gmra.mxu0 %v1230
      %v1421 = vpop.f32.mrf.mxu0
      %v1422 = vadd.f32 %v1181, %v1421
      %v1423 = vpop.f32.mrf.mxu0
      %1424 = vmatprep.mubr.f32.mxu0 0.0
      %1425 = vmatmul.mubr.f32.gmra.mxu0 %v1233
      %v1426 = vpop.f32.mrf.mxu0
      %v1427 = vadd.f32 %v1181, %v1426
      %v1428 = vpop.f32.mrf.mxu0
      %1429 = vmatprep.mubr.f32.mxu0 0.0
      %1430 = vmatmul.mubr.f32.gmra.mxu0 %v1236
      %v1431 = vpop.f32.mrf.mxu0
      %v1432 = vadd.f32 %v1181, %v1431
      %v1433 = vpop.f32.mrf.mxu0
      %1434 = vmatprep.mubr.f32.mxu0 0.0
      %1435 = vmatmul.mubr.f32.gmra.mxu0 %v1239
      %v1436 = vpop.f32.mrf.mxu0
      %v1437 = vadd.f32 %v1181, %v1436
      %v1438 = vpop.f32.mrf.mxu0
      %1439 = vmatprep.mubr.f32.mxu0 0.0
      %1440 = vmatmul.mubr.f32.gmra.mxu0 %v1242
      %v1441 = vpop.f32.mrf.mxu0
      %v1442 = vadd.f32 %v1181, %v1441
      %v1443 = vpop.f32.mrf.mxu0
      %1444 = vmatprep.mubr.f32.mxu0 0.0
      %1445 = vmatmul.mubr.f32.gmra.mxu0 %v1245
      %v1446 = vpop.f32.mrf.mxu0
      %v1447 = vadd.f32 %v1181, %v1446
      %v1448 = vpop.f32.mrf.mxu0
      %1449 = vmatprep.mubr.f32.mxu0 0.0
      %1450 = vmatmul.mubr.f32.gmra.mxu0 %v1248
      %v1451 = vpop.f32.mrf.mxu0
      %v1452 = vadd.f32 %v1181, %v1451
      %v1453 = vpop.f32.mrf.mxu0
      %1454 = vmatprep.mubr.f32.mxu0 0.0
      %1455 = vmatmul.mubr.f32.gmra.mxu0 %v1251
      %v1456 = vpop.f32.mrf.mxu0
      %v1457 = vadd.f32 %v1181, %v1456
      %v1458 = vpop.f32.mrf.mxu0
      %1459 = vmatprep.mubr.f32.mxu0 0.0
      %1460 = vmatmul.mubr.f32.gmra.mxu0 %v1254
      %v1461 = vpop.f32.mrf.mxu0
      %v1462 = vadd.f32 %v1181, %v1461
      %v1463 = vpop.f32.mrf.mxu0
      %1464 = vmatprep.mubr.f32.mxu0 0.0
      %1465 = vmatmul.mubr.f32.gmra.mxu0 %v1257
      %v1466 = vpop.f32.mrf.mxu0
      %v1467 = vadd.f32 %v1181, %v1466
      %v1468 = vpop.f32.mrf.mxu0
      %1469 = vmatprep.mubr.f32.mxu0 0.0
      %1470 = vmatmul.mubr.f32.gmra.mxu0 %v1260
      %v1471 = vpop.f32.mrf.mxu0
      %v1472 = vadd.f32 %v1181, %v1471
      %v1473 = vpop.f32.mrf.mxu0
      %1474 = vmatprep.mubr.f32.mxu0 0.0
      %1475 = vmatmul.mubr.f32.gmra.mxu0 %v1263
      %v1476 = vpop.f32.mrf.mxu0
      %v1477 = vadd.f32 %v1181, %v1476
      %v1478 = vpop.f32.mrf.mxu0
      %1479 = vmatprep.mubr.f32.mxu0 0.0
      %1480 = vmatmul.mubr.f32.gmra.mxu0 %v1266
      %v1481 = vpop.f32.mrf.mxu0
      %v1482 = vadd.f32 %v1181, %v1481
      %v1483 = vpop.f32.mrf.mxu0
      %1484 = vmatprep.mubr.f32.mxu0 0.0
      %1485 = vmatmul.mubr.f32.gmra.mxu0 %v1269
      %v1486 = vpop.f32.mrf.mxu0
      %v1487 = vadd.f32 %v1181, %v1486
      %v1488 = vpop.f32.mrf.mxu0
      %1489 = vmatprep.mubr.f32.mxu0 0.0
      %1490 = vmatmul.mubr.f32.gmra.mxu0 %v1272
      %v1491 = vpop.f32.mrf.mxu0
      %v1492 = vadd.f32 %v1181, %v1491
      %v1493 = vpop.f32.mrf.mxu0
      %1494 = vmatprep.mubr.f32.mxu0 0.0
      %1495 = vmatmul.mubr.f32.gmra.mxu0 %v1275
      %v1496 = vpop.f32.mrf.mxu0
      %v1497 = vadd.f32 %v1181, %v1496
      %v1498 = vpop.f32.mrf.mxu0
      %1499 = vmatprep.mubr.f32.mxu0 0.0
      %1500 = vmatmul.mubr.f32.gmra.mxu0 %v1278
      %v1501 = vpop.f32.mrf.mxu0
      %v1502 = vadd.f32 %v1181, %v1501
      %v1503 = vpop.f32.mrf.mxu0
      %1504 = vdwg.mxu0
      %v1505 = vmax.f32 %v1347, 0.0
      %v1506 = vmax.f32 %v1352, 0.0
      %v1507 = vmax.f32 %v1357, 0.0
      %v1508 = vmax.f32 %v1362, 0.0
      %v1509 = vmax.f32 %v1367, 0.0
      %v1510 = vmax.f32 %v1372, 0.0
      %v1511 = vmax.f32 %v1377, 0.0
      %v1512 = vmax.f32 %v1382, 0.0
      %v1513 = vmax.f32 %v1387, 0.0
      %v1514 = vmax.f32 %v1392, 0.0
      %v1515 = vmax.f32 %v1397, 0.0
      %v1516 = vmax.f32 %v1402, 0.0
      %v1517 = vmax.f32 %v1407, 0.0
      %v1518 = vmax.f32 %v1412, 0.0
      %v1519 = vmax.f32 %v1417, 0.0
      %v1520 = vmax.f32 %v1422, 0.0
      %v1521 = vmax.f32 %v1427, 0.0
      %v1522 = vmax.f32 %v1432, 0.0
      %v1523 = vmax.f32 %v1437, 0.0
      %v1524 = vmax.f32 %v1442, 0.0
      %v1525 = vmax.f32 %v1447, 0.0
      %v1526 = vmax.f32 %v1452, 0.0
      %v1527 = vmax.f32 %v1457, 0.0
      %v1528 = vmax.f32 %v1462, 0.0
      %v1529 = vmax.f32 %v1467, 0.0
      %v1530 = vmax.f32 %v1472, 0.0
      %v1531 = vmax.f32 %v1477, 0.0
      %v1532 = vmax.f32 %v1482, 0.0
      %v1533 = vmax.f32 %v1487, 0.0
      %v1534 = vmax.f32 %v1492, 0.0
      %v1535 = vmax.f32 %v1497, 0.0
      %v1536 = vmax.f32 %v1502, 0.0
      %v1537 = vld [vmem:[%s6] sm:$0xff]
      %v1538 = vld [vmem:[%s6 + $0x8] sm:$0xff]
      %v1539 = vld [vmem:[%s6 + $0x10] sm:$0xff]
      %v1540 = vld [vmem:[%s6 + $0x18] sm:$0xff]
      %v1541 = vld [vmem:[%s7] sm:$0x1]
      %v1543 = vlaneseq
      %v1544 = vshrl.u32 %v1543, 7
      %v1545 = vsub.s32 0, %v1544
      %v1546 = vrot.slane %v1541, %v1545
      %v1549 = vsel %vm1183, %v1505, 0
      %v1552 = vsel %vm1183, %v1506, 0
      %v1555 = vsel %vm1183, %v1507, 0
      %v1558 = vsel %vm1183, %v1508, 0
      %v1561 = vsel %vm1183, %v1509, 0
      %v1564 = vsel %vm1183, %v1510, 0
      %v1567 = vsel %vm1183, %v1511, 0
      %v1570 = vsel %vm1183, %v1512, 0
      %v1573 = vsel %vm1183, %v1513, 0
      %v1576 = vsel %vm1183, %v1514, 0
      %v1579 = vsel %vm1183, %v1515, 0
      %v1582 = vsel %vm1183, %v1516, 0
      %v1585 = vsel %vm1183, %v1517, 0
      %v1588 = vsel %vm1183, %v1518, 0
      %v1591 = vsel %vm1183, %v1519, 0
      %v1594 = vsel %vm1183, %v1520, 0
      %v1597 = vsel %vm1183, %v1521, 0
      %v1600 = vsel %vm1183, %v1522, 0
      %v1603 = vsel %vm1183, %v1523, 0
      %v1606 = vsel %vm1183, %v1524, 0
      %v1609 = vsel %vm1183, %v1525, 0
      %v1612 = vsel %vm1183, %v1526, 0
      %v1615 = vsel %vm1183, %v1527, 0
      %v1618 = vsel %vm1183, %v1528, 0
      %v1621 = vsel %vm1183, %v1529, 0
      %v1624 = vsel %vm1183, %v1530, 0
      %v1627 = vsel %vm1183, %v1531, 0
      %v1630 = vsel %vm1183, %v1532, 0
      %v1633 = vsel %vm1183, %v1533, 0
      %v1636 = vsel %vm1183, %v1534, 0
      %v1639 = vsel %vm1183, %v1535, 0
      %v1642 = vsel %vm1183, %v1536, 0
      %1644 = vmatprep.subr.mxu0 0.0
      %1645 = vmatpush1.msra.mxu0 0.0
      %1646 = vmatprep.subr.mxu0 0.0
      %1647 = vmatpush1.msra.mxu0 0.0
      %1648 = vmatprep.subr.mxu0 0.0
      %1649 = vmatpush1.msra.mxu0 0.0
      %1650 = vmatprep.subr.mxu0 0.0
      %1651 = vmatpush1.msra.mxu0 0.0
      %1652 = vmatprep.subr.mxu0 0.0
      %1653 = vmatpush1.msra.mxu0 0.0
      %1654 = vmatprep.subr.mxu0 0.0
      %1655 = vmatpush1.msra.mxu0 0.0
      %1656 = vmatprep.subr.mxu0 0.0
      %1657 = vmatpush1.msra.mxu0 0.0
      %1658 = vmatprep.subr.mxu0 0.0
      %1659 = vmatpush1.msra.mxu0 0.0
      %1660 = vmatprep.subr.mxu0 0.0
      %1661 = vmatpush1.msra.mxu0 0.0
      %1662 = vmatprep.subr.mxu0 0.0
      %1663 = vmatpush1.msra.mxu0 0.0
      %1664 = vmatprep.subr.mxu0 0.0
      %1665 = vmatpush1.msra.mxu0 0.0
      %1666 = vmatprep.subr.mxu0 0.0
      %1667 = vmatpush1.msra.mxu0 0.0
      %1668 = vmatprep.subr.mxu0 0.0
      %1669 = vmatpush1.msra.mxu0 %v1540
      %1670 = vmatprep.subr.mxu0 0.0
      %1671 = vmatpush1.msra.mxu0 %v1539
      %1672 = vmatprep.subr.mxu0 0.0
      %1673 = vmatpush1.msra.mxu0 %v1538
      %1674 = vmatprep.subr.mxu0 0.0
      %1675 = vmatpush1.msra.mxu0 %v1537
      %1676 = vmatprep.subr.mxu0 0.0
      %1677 = vmatpush2.msra.mxu0 0.0
      %1678 = vmatprep.subr.mxu0 0.0
      %1679 = vmatpush2.msra.mxu0 0.0
      %1680 = vmatprep.subr.mxu0 0.0
      %1681 = vmatpush2.msra.mxu0 0.0
      %1682 = vmatprep.subr.mxu0 0.0
      %1683 = vmatpush2.msra.mxu0 0.0
      %1684 = vmatprep.subr.mxu0 0.0
      %1685 = vmatpush2.msra.mxu0 0.0
      %1686 = vmatprep.subr.mxu0 0.0
      %1687 = vmatpush2.msra.mxu0 0.0
      %1688 = vmatprep.subr.mxu0 0.0
      %1689 = vmatpush2.msra.mxu0 0.0
      %1690 = vmatprep.subr.mxu0 0.0
      %1691 = vmatpush2.msra.mxu0 0.0
      %1692 = vmatprep.subr.mxu0 0.0
      %1693 = vmatpush2.msra.mxu0 0.0
      %1694 = vmatprep.subr.mxu0 0.0
      %1695 = vmatpush2.msra.mxu0 0.0
      %1696 = vmatprep.subr.mxu0 0.0
      %1697 = vmatpush2.msra.mxu0 0.0
      %1698 = vmatprep.subr.mxu0 0.0
      %1699 = vmatpush2.msra.mxu0 0.0
      %1700 = vmatprep.subr.mxu0 0.0
      %1701 = vmatpush2.msra.mxu0 0.0
      %1702 = vmatprep.subr.mxu0 0.0
      %1703 = vmatpush2.msra.mxu0 0.0
      %1704 = vmatprep.subr.mxu0 0.0
      %1705 = vmatpush2.msra.mxu0 0.0
      %1706 = vmatprep.subr.mxu0 0.0
      %1707 = vmatpush2.msra.mxu0 0.0
      %1708 = vmatprep.mubr.f32.mxu0 0.0
      %1709 = vmatmul.mubr.f32.gmra.mxu0 %v1549
      %v1710 = vpop.f32.mrf.mxu0
      %v1711 = vadd.f32 %v1546, %v1710
      %v1712 = vpop.f32.mrf.mxu0
      %1713 = vmatprep.mubr.f32.mxu0 0.0
      %1714 = vmatmul.mubr.f32.gmra.mxu0 %v1552
      %v1715 = vpop.f32.mrf.mxu0
      %v1716 = vadd.f32 %v1546, %v1715
      %v1717 = vpop.f32.mrf.mxu0
      %1718 = vmatprep.mubr.f32.mxu0 0.0
      %1719 = vmatmul.mubr.f32.gmra.mxu0 %v1555
      %v1720 = vpop.f32.mrf.mxu0
      %v1721 = vadd.f32 %v1546, %v1720
      %v1722 = vpop.f32.mrf.mxu0
      %1723 = vmatprep.mubr.f32.mxu0 0.0
      %1724 = vmatmul.mubr.f32.gmra.mxu0 %v1558
      %v1725 = vpop.f32.mrf.mxu0
      %v1726 = vadd.f32 %v1546, %v1725
      %v1727 = vpop.f32.mrf.mxu0
      %1728 = vmatprep.mubr.f32.mxu0 0.0
      %1729 = vmatmul.mubr.f32.gmra.mxu0 %v1561
      %v1730 = vpop.f32.mrf.mxu0
      %v1731 = vadd.f32 %v1546, %v1730
      %v1732 = vpop.f32.mrf.mxu0
      %1733 = vmatprep.mubr.f32.mxu0 0.0
      %1734 = vmatmul.mubr.f32.gmra.mxu0 %v1564
      %v1735 = vpop.f32.mrf.mxu0
      %v1736 = vadd.f32 %v1546, %v1735
      %v1737 = vpop.f32.mrf.mxu0
      %1738 = vmatprep.mubr.f32.mxu0 0.0
      %1739 = vmatmul.mubr.f32.gmra.mxu0 %v1567
      %v1740 = vpop.f32.mrf.mxu0
      %v1741 = vadd.f32 %v1546, %v1740
      %v1742 = vpop.f32.mrf.mxu0
      %1743 = vmatprep.mubr.f32.mxu0 0.0
      %1744 = vmatmul.mubr.f32.gmra.mxu0 %v1570
      %v1745 = vpop.f32.mrf.mxu0
      %v1746 = vadd.f32 %v1546, %v1745
      %v1747 = vpop.f32.mrf.mxu0
      %1748 = vmatprep.mubr.f32.mxu0 0.0
      %1749 = vmatmul.mubr.f32.gmra.mxu0 %v1573
      %v1750 = vpop.f32.mrf.mxu0
      %v1751 = vadd.f32 %v1546, %v1750
      %v1752 = vpop.f32.mrf.mxu0
      %1753 = vmatprep.mubr.f32.mxu0 0.0
      %1754 = vmatmul.mubr.f32.gmra.mxu0 %v1576
      %v1755 = vpop.f32.mrf.mxu0
      %v1756 = vadd.f32 %v1546, %v1755
      %v1757 = vpop.f32.mrf.mxu0
      %1758 = vmatprep.mubr.f32.mxu0 0.0
      %1759 = vmatmul.mubr.f32.gmra.mxu0 %v1579
      %v1760 = vpop.f32.mrf.mxu0
      %v1761 = vadd.f32 %v1546, %v1760
      %v1762 = vpop.f32.mrf.mxu0
      %1763 = vmatprep.mubr.f32.mxu0 0.0
      %1764 = vmatmul.mubr.f32.gmra.mxu0 %v1582
      %v1765 = vpop.f32.mrf.mxu0
      %v1766 = vadd.f32 %v1546, %v1765
      %v1767 = vpop.f32.mrf.mxu0
      %1768 = vmatprep.mubr.f32.mxu0 0.0
      %1769 = vmatmul.mubr.f32.gmra.mxu0 %v1585
      %v1770 = vpop.f32.mrf.mxu0
      %v1771 = vadd.f32 %v1546, %v1770
      %v1772 = vpop.f32.mrf.mxu0
      %1773 = vmatprep.mubr.f32.mxu0 0.0
      %1774 = vmatmul.mubr.f32.gmra.mxu0 %v1588
      %v1775 = vpop.f32.mrf.mxu0
      %v1776 = vadd.f32 %v1546, %v1775
      %v1777 = vpop.f32.mrf.mxu0
      %1778 = vmatprep.mubr.f32.mxu0 0.0
      %1779 = vmatmul.mubr.f32.gmra.mxu0 %v1591
      %v1780 = vpop.f32.mrf.mxu0
      %v1781 = vadd.f32 %v1546, %v1780
      %v1782 = vpop.f32.mrf.mxu0
      %1783 = vmatprep.mubr.f32.mxu0 0.0
      %1784 = vmatmul.mubr.f32.gmra.mxu0 %v1594
      %v1785 = vpop.f32.mrf.mxu0
      %v1786 = vadd.f32 %v1546, %v1785
      %v1787 = vpop.f32.mrf.mxu0
      %1788 = vmatprep.mubr.f32.mxu0 0.0
      %1789 = vmatmul.mubr.f32.gmra.mxu0 %v1597
      %v1790 = vpop.f32.mrf.mxu0
      %v1791 = vadd.f32 %v1546, %v1790
      %v1792 = vpop.f32.mrf.mxu0
      %1793 = vmatprep.mubr.f32.mxu0 0.0
      %1794 = vmatmul.mubr.f32.gmra.mxu0 %v1600
      %v1795 = vpop.f32.mrf.mxu0
      %v1796 = vadd.f32 %v1546, %v1795
      %v1797 = vpop.f32.mrf.mxu0
      %1798 = vmatprep.mubr.f32.mxu0 0.0
      %1799 = vmatmul.mubr.f32.gmra.mxu0 %v1603
      %v1800 = vpop.f32.mrf.mxu0
      %v1801 = vadd.f32 %v1546, %v1800
      %v1802 = vpop.f32.mrf.mxu0
      %1803 = vmatprep.mubr.f32.mxu0 0.0
      %1804 = vmatmul.mubr.f32.gmra.mxu0 %v1606
      %v1805 = vpop.f32.mrf.mxu0
      %v1806 = vadd.f32 %v1546, %v1805
      %v1807 = vpop.f32.mrf.mxu0
      %1808 = vmatprep.mubr.f32.mxu0 0.0
      %1809 = vmatmul.mubr.f32.gmra.mxu0 %v1609
      %v1810 = vpop.f32.mrf.mxu0
      %v1811 = vadd.f32 %v1546, %v1810
      %v1812 = vpop.f32.mrf.mxu0
      %1813 = vmatprep.mubr.f32.mxu0 0.0
      %1814 = vmatmul.mubr.f32.gmra.mxu0 %v1612
      %v1815 = vpop.f32.mrf.mxu0
      %v1816 = vadd.f32 %v1546, %v1815
      %v1817 = vpop.f32.mrf.mxu0
      %1818 = vmatprep.mubr.f32.mxu0 0.0
      %1819 = vmatmul.mubr.f32.gmra.mxu0 %v1615
      %v1820 = vpop.f32.mrf.mxu0
      %v1821 = vadd.f32 %v1546, %v1820
      %v1822 = vpop.f32.mrf.mxu0
      %1823 = vmatprep.mubr.f32.mxu0 0.0
      %1824 = vmatmul.mubr.f32.gmra.mxu0 %v1618
      %v1825 = vpop.f32.mrf.mxu0
      %v1826 = vadd.f32 %v1546, %v1825
      %v1827 = vpop.f32.mrf.mxu0
      %1828 = vmatprep.mubr.f32.mxu0 0.0
      %1829 = vmatmul.mubr.f32.gmra.mxu0 %v1621
      %v1830 = vpop.f32.mrf.mxu0
      %v1831 = vadd.f32 %v1546, %v1830
      %v1832 = vpop.f32.mrf.mxu0
      %1833 = vmatprep.mubr.f32.mxu0 0.0
      %1834 = vmatmul.mubr.f32.gmra.mxu0 %v1624
      %v1835 = vpop.f32.mrf.mxu0
      %v1836 = vadd.f32 %v1546, %v1835
      %v1837 = vpop.f32.mrf.mxu0
      %1838 = vmatprep.mubr.f32.mxu0 0.0
      %1839 = vmatmul.mubr.f32.gmra.mxu0 %v1627
      %v1840 = vpop.f32.mrf.mxu0
      %v1841 = vadd.f32 %v1546, %v1840
      %v1842 = vpop.f32.mrf.mxu0
      %1843 = vmatprep.mubr.f32.mxu0 0.0
      %1844 = vmatmul.mubr.f32.gmra.mxu0 %v1630
      %v1845 = vpop.f32.mrf.mxu0
      %v1846 = vadd.f32 %v1546, %v1845
      %v1847 = vpop.f32.mrf.mxu0
      %1848 = vmatprep.mubr.f32.mxu0 0.0
      %1849 = vmatmul.mubr.f32.gmra.mxu0 %v1633
      %v1850 = vpop.f32.mrf.mxu0
      %v1851 = vadd.f32 %v1546, %v1850
      %v1852 = vpop.f32.mrf.mxu0
      %1853 = vmatprep.mubr.f32.mxu0 0.0
      %1854 = vmatmul.mubr.f32.gmra.mxu0 %v1636
      %v1855 = vpop.f32.mrf.mxu0
      %v1856 = vadd.f32 %v1546, %v1855
      %v1857 = vpop.f32.mrf.mxu0
      %1858 = vmatprep.mubr.f32.mxu0 0.0
      %1859 = vmatmul.mubr.f32.gmra.mxu0 %v1639
      %v1860 = vpop.f32.mrf.mxu0
      %v1861 = vadd.f32 %v1546, %v1860
      %v1862 = vpop.f32.mrf.mxu0
      %1863 = vmatprep.mubr.f32.mxu0 0.0
      %1864 = vmatmul.mubr.f32.gmra.mxu0 %v1642
      %v1865 = vpop.f32.mrf.mxu0
      %v1866 = vadd.f32 %v1546, %v1865
      %v1867 = vpop.f32.mrf.mxu0
      %1868 = vdwg.mxu0
      %vm1869 = vcmask 130048
      %1870 = vst.msk [vmem:[%s307] sm:$0xff] %vm1869, %v1711
      %1871 = vst.msk [vmem:[%s307 + $0x8] sm:$0xff] %vm1869, %v1716
      %1872 = vst.msk [vmem:[%s307 + $0x10] sm:$0xff] %vm1869, %v1721
      %1873 = vst.msk [vmem:[%s307 + $0x18] sm:$0xff] %vm1869, %v1726
      %1874 = vst.msk [vmem:[%s307 + $0x20] sm:$0xff] %vm1869, %v1731
      %1875 = vst.msk [vmem:[%s307 + $0x28] sm:$0xff] %vm1869, %v1736
      %1876 = vst.msk [vmem:[%s307 + $0x30] sm:$0xff] %vm1869, %v1741
      %1877 = vst.msk [vmem:[%s307 + $0x38] sm:$0xff] %vm1869, %v1746
      %1878 = vst.msk [vmem:[%s307 + $0x40] sm:$0xff] %vm1869, %v1751
      %1879 = vst.msk [vmem:[%s307 + $0x48] sm:$0xff] %vm1869, %v1756
      %1880 = vst.msk [vmem:[%s307 + $0x50] sm:$0xff] %vm1869, %v1761
      %1881 = vst.msk [vmem:[%s307 + $0x58] sm:$0xff] %vm1869, %v1766
      %1882 = vst.msk [vmem:[%s307 + $0x60] sm:$0xff] %vm1869, %v1771
      %1883 = vst.msk [vmem:[%s307 + $0x68] sm:$0xff] %vm1869, %v1776
      %1884 = vst.msk [vmem:[%s307 + $0x70] sm:$0xff] %vm1869, %v1781
      %1885 = vst.msk [vmem:[%s307 + $0x78] sm:$0xff] %vm1869, %v1786
      %1886 = vst.msk [vmem:[%s307 + $0x80] sm:$0xff] %vm1869, %v1791
      %1887 = vst.msk [vmem:[%s307 + $0x88] sm:$0xff] %vm1869, %v1796
      %1888 = vst.msk [vmem:[%s307 + $0x90] sm:$0xff] %vm1869, %v1801
      %1889 = vst.msk [vmem:[%s307 + $0x98] sm:$0xff] %vm1869, %v1806
      %1890 = vst.msk [vmem:[%s307 + $0xa0] sm:$0xff] %vm1869, %v1811
      %1891 = vst.msk [vmem:[%s307 + $0xa8] sm:$0xff] %vm1869, %v1816
      %1892 = vst.msk [vmem:[%s307 + $0xb0] sm:$0xff] %vm1869, %v1821
      %1893 = vst.msk [vmem:[%s307 + $0xb8] sm:$0xff] %vm1869, %v1826
      %1894 = vst.msk [vmem:[%s307 + $0xc0] sm:$0xff] %vm1869, %v1831
      %1895 = vst.msk [vmem:[%s307 + $0xc8] sm:$0xff] %vm1869, %v1836
      %1896 = vst.msk [vmem:[%s307 + $0xd0] sm:$0xff] %vm1869, %v1841
      %1897 = vst.msk [vmem:[%s307 + $0xd8] sm:$0xff] %vm1869, %v1846
      %1898 = vst.msk [vmem:[%s307 + $0xe0] sm:$0xff] %vm1869, %v1851
      %1899 = vst.msk [vmem:[%s307 + $0xe8] sm:$0xff] %vm1869, %v1856
      %1900 = vst.msk [vmem:[%s307 + $0xf0] sm:$0xff] %vm1869, %v1861
      %1901 = vst.msk [vmem:[%s307 + $0xf8] sm:$0xff] %vm1869, %v1866
      %s1902 = smul.u32 32, %s19
      %p1903 = scmp.lt.s32.totalorder %s1902, 127
      %s1904 = scalar_select %p1903, %s1902, 127
      %s1905 = smul.addr %s1904, 8
      %s1906 = scalar_lea.vmem %s8, %s1905
      // Predicated region
      $region53: #{_forward_impl.1} parent=51 // pred_check
        %p1907 = pneg %p210
      $region54: #{_forward_impl.1} parent=51 // pred_check_branch
        %1909 = sbr.rel (%p1907) target = $region56
      $region55: #{_forward_impl.1} parent=51 // pred_region
        %s1910 = smul.u32 32, %s19
      $region56: #{_forward_impl.1} parent=51 // pred_fallthru
        _
    $region52: #{_forward_impl.1} parent=5 // pred_fallthru
      _
    %p1911 = scmp.le.s32.totalorder 2, %s14
    // Predicated region
    $region57: #{_forward_impl.1} parent=5 // pred_check
      %p1912 = pneg %p1911
    $region58: #{_forward_impl.1} parent=5 // pred_check_branch
      %1914 = sbr.rel (%p1912) target = $region60
    $region59: #{_forward_impl.1} parent=5 // pred_region
      %s1915 = ssub.s32 %s14, 2
      // Predicated region
      $region61: #{_forward_impl.1} parent=59 // pred_check
        %p1916 = pneg %p216
      $region62: #{_forward_impl.1} parent=59 // pred_check_branch
        %1918 = sbr.rel (%p1916) target = $region64
      $region63: #{_forward_impl.1} parent=59 // pred_region
        %s1919 = smul.u32 32, %s20
        %p1920 = scmp.lt.s32.totalorder %s1919, 127
        %s1921 = scalar_select %p1920, %s1919, 127
        %s1922 = smul.addr %s1921, 8
        %s1923 = scalar_lea.vmem %s8, %s1922
      $region64: #{_forward_impl.1} parent=59 // pred_fallthru
        _
    $region60: #{_forward_impl.1} parent=5 // pred_fallthru
      _
  $region6: #{_forward_impl.1} parent=0 // loop_footer
    %s18 = sadd.s32 1, %s14
  $region7: #{_forward_impl.1} parent=0 // loop_footer_branch
    %13 = sbr.rel target = $region3
  $region8: #{_forward_impl.1} parent=0 // loop_exit
    _

</llo_original>
